<compile_context>
chip_gen: v5e
topology: v5e:2x2
jax: 0.10.0
libtpu: 0.0.40
codegen_flags: <defaults>
</compile_context>

<pallas_src>
import math
from functools import partial

import jax
import jax.numpy as jnp
from jax import lax
from jax.experimental import pallas as pl
from jax.experimental.pallas import tpu as pltpu


# --------------------------------------------------------------------------
# sinusoidal tables
# --------------------------------------------------------------------------
def _inv_freq(half):
    return jnp.exp(jnp.arange(half, dtype=jnp.float32)
                   * -(math.log(10000.0) / (half - 1)))


def sinusoidal_rel_pos_embed(L, dim):
    # rows = relative positions -L .. L-1 (matches the torch module for
    # seq_len <= origin_shift; the zeroed padding_idx row is never selected).
    half = dim // 2
    inv = _inv_freq(half)
    rel = jnp.arange(-L, L, dtype=jnp.float32)
    arg = rel[:, None] * inv[None, :]
    return jnp.concatenate([jnp.sin(arg), jnp.cos(arg)], axis=1)   # (2L, dim)


def absolute_sincos(L, dim):
    # [sin(i*w) | cos(i*w)] for absolute positions 0..L-1 (= rel rows L..2L-1).
    half = dim // 2
    inv = _inv_freq(half)
    p = jnp.arange(L, dtype=jnp.float32)
    arg = p[:, None] * inv[None, :]
    return jnp.concatenate([jnp.sin(arg), jnp.cos(arg)], axis=1)   # (L, dim)


# --------------------------------------------------------------------------
# Pallas kernel: one batch element per grid point, all heads fused
# --------------------------------------------------------------------------
def _attn_kernel(x_ref, w_ref, pos_ref, rr_ref, rw_ref, bias_ref, o_ref,
                 *, n_head, D, hd, inv_scale):
    half = hd // 2

    x = x_ref[0]                    # (L, D)   bf16
    w = w_ref[...]                  # (D, 3D)  bf16
    # fused QKV projection: one MXU matmul, f32 accumulation
    qkv = jnp.dot(x, w, preferred_element_type=jnp.float32)        # (L, 3D)

    pos = pos_ref[...]              # (L, hd) f32: [sin | cos] of absolute pos
    sin_t = pos[:, :half]           # (L, half)
    cos_t = pos[:, half:]           # (L, half)
    pos_b = pos.astype(jnp.bfloat16)

    rr = rr_ref[...]                # (n_head, hd)
    rw = rw_ref[...]                # (n_head, hd)
    bias = bias_ref[0]              # (1, L) additive key-mask bias (0 / -1e30)

    dn = (((1,), (1,)), ((), ()))   # contract last dims, no batch dims

    outs = []
    for h in range(n_head):
        q = qkv[:, h * hd:(h + 1) * hd]                       # (L, hd) f32
        k = qkv[:, D + h * hd:D + (h + 1) * hd]
        v = qkv[:, 2 * D + h * hd:2 * D + (h + 1) * hd]

        k_b = k.astype(jnp.bfloat16)

        # AC[i,j] = (q_i + r_r) . k_j
        ac = lax.dot_general((q + rr[h:h + 1, :]).astype(jnp.bfloat16), k_b,
                             dn, preferred_element_type=jnp.float32)

        # BD_shift[i,j] = (q_i + r_w) . pos_rel[j - i]
        u = q + rw[h:h + 1, :]
        u_s, u_c = u[:, :half], u[:, half:]
        q_rot = jnp.concatenate([u_s * cos_t + u_c * sin_t,
                                 u_c * cos_t - u_s * sin_t], axis=-1)
        bd = lax.dot_general(q_rot.astype(jnp.bfloat16), pos_b, dn,
                             preferred_element_type=jnp.float32)

        # E_shift[i,j] = k_j . pos_rel[i - j]
        k_s, k_c = k[:, :half], k[:, half:]
        k_rot = jnp.concatenate([k_s * cos_t + k_c * sin_t,
                                 k_c * cos_t - k_s * sin_t], axis=-1)
        e = lax.dot_general(pos_b, k_rot.astype(jnp.bfloat16), dn,
                            preferred_element_type=jnp.float32)

        logits = (ac + bd + e) * inv_scale + bias             # (L, L) f32
        m = jnp.max(logits, axis=-1, keepdims=True)
        p = jnp.exp(logits - m)
        denom = jnp.sum(p, axis=-1, keepdims=True)
        attn = p * pl.reciprocal(denom, approx=True)
        # TODO(synk): attention-map dropout is identity here (eval mode).

        outs.append(jnp.dot(attn.astype(jnp.bfloat16), v.astype(jnp.bfloat16),
                            preferred_element_type=jnp.float32))  # (L, hd)

    # lane-dense (L, D) store
    o_ref[0] = jnp.concatenate(outs, axis=-1).astype(o_ref.dtype)


# --------------------------------------------------------------------------
# wrapper
# --------------------------------------------------------------------------
def relative_multi_head_attn(x, mask, qkv_weight, r_r_bias, r_w_bias,
                             *, n_head, scale=False):
    B, L, D = x.shape
    hd = D // n_head
    assert n_head * hd == D and hd % 2 == 0 and hd >= 4
    inv_scale = 1.0 / (math.sqrt(hd) if scale else 1.0)

    # torch nn.Linear: qkv = x @ W.T -> fused (D, 3D) weight, bf16 for the MXU
    w = qkv_weight.T.astype(jnp.bfloat16)                    # (D, 3D)
    x_b = x.astype(jnp.bfloat16)
    pos = absolute_sincos(L, hd)                             # (L, hd) f32
    rr = r_r_bias.astype(jnp.float32)                        # (n_head, hd)
    rw = r_w_bias.astype(jnp.float32)
    bias = jnp.where(mask == 0, -1e30, 0.0).astype(jnp.float32).reshape(B, 1, L)

    out = pl.pallas_call(
        partial(_attn_kernel, n_head=n_head, D=D, hd=hd, inv_scale=inv_scale),
        out_shape=jax.ShapeDtypeStruct((B, L, D), jnp.float32),
        grid_spec=pltpu.PrefetchScalarGridSpec(
            num_scalar_prefetch=0,
            grid=(B,),
            in_specs=[
                pl.BlockSpec((1, L, D), lambda b: (b, 0, 0)),     # x
                pl.BlockSpec((D, 3 * D), lambda b: (0, 0)),       # fused qkv weight
                pl.BlockSpec((L, hd), lambda b: (0, 0)),          # abs sin/cos table
                pl.BlockSpec((n_head, hd), lambda b: (0, 0)),     # r_r_bias
                pl.BlockSpec((n_head, hd), lambda b: (0, 0)),     # r_w_bias
                pl.BlockSpec((1, 1, L), lambda b: (b, 0, 0)),     # additive mask bias
            ],
            out_specs=pl.BlockSpec((1, L, D), lambda b: (b, 0, 0)),
        ),
        compiler_params=pltpu.CompilerParams(
            dimension_semantics=("parallel",),
            vmem_limit_bytes=64 * 1024 * 1024,
        ),
    )(x_b, w, pos, rr, rw, bias)
    return out


# --------------------------------------------------------------------------
# pure-JAX reference mirroring the PyTorch forward
# --------------------------------------------------------------------------
def _shift_ref(BD):
    b, n, L, _ = BD.shape
    zero = jnp.zeros((b, n, L, 1), BD.dtype)
    BD = jnp.concatenate([BD, zero], axis=-1).reshape(b, n, -1, L)
    BD = BD[:, :, :-1].reshape(b, n, L, -1)
    return BD[:, :, :, L:]


def _transpose_shift_ref(E):
    b, n, L, _ = E.shape
    zero = jnp.zeros((b, n, L, 1), E.dtype)
    E = jnp.concatenate([E, zero], axis=-1).reshape(b, n, -1, L)
    idx = jnp.arange(L) * 2 + 1
    E = E[:, :, idx]
    return jnp.swapaxes(E, -1, -2)


def reference_forward(x, mask, qkv_weight, r_r_bias, r_w_bias, *, n_head, scale=False):
    B, L, D = x.shape
    hd = D // n_head
    scale_val = math.sqrt(hd) if scale else 1.0
    pos = sinusoidal_rel_pos_embed(L, hd)
    qkv = x @ qkv_weight.T
    q, k, v = jnp.split(qkv, 3, axis=-1)
    q = q.reshape(B, L, n_head, hd).transpose(0, 2, 1, 3)
    k = k.reshape(B, L, n_head, hd).transpose(0, 2, 1, 3)
    v = v.reshape(B, L, n_head, hd).transpose(0, 2, 1, 3)
    rw_head_q = q + r_r_bias[None, :, None, :]
    AC = jnp.einsum('bnqd,bnkd->bnqk', rw_head_q, k)
    D_ = jnp.einsum('nd,ld->nl', r_w_bias, pos)[None, :, None]
    B_ = jnp.einsum('bnqd,ld->bnql', q, pos)
    E_ = jnp.einsum('bnqd,ld->bnql', k, pos)
    BDE = _shift_ref(B_ + D_) + _transpose_shift_ref(E_)
    attn = (AC + BDE) / scale_val
    attn = jnp.where(mask[:, None, None, :] == 0, -jnp.inf, attn)
    attn = jax.nn.softmax(attn, axis=-1)
    out = jnp.einsum('bnqk,bnkd->bnqd', attn, v)
    return out.transpose(0, 2, 1, 3).reshape(B, L, D)


# --------------------------------------------------------------------------
# test
# --------------------------------------------------------------------------
def _run_case(B, L, D, n_head, scale, n_pad, key, atol, rtol):
    hd = D // n_head
    kx, kw, kr, ks = jax.random.split(key, 4)
    x = jax.random.normal(kx, (B, L, D), dtype=jnp.float32)
    mask = jnp.ones((B, L), dtype=jnp.float32)
    if n_pad:
        mask = mask.at[-1, L - n_pad:].set(0.0)   # pad last keys of last batch
    qkv_weight = jax.random.normal(kw, (3 * D, D), dtype=jnp.float32) * 0.1
    xav = math.sqrt(2.0 / (n_head + hd))
    r_r_bias = jax.random.normal(kr, (n_head, hd), dtype=jnp.float32) * xav
    r_w_bias = jax.random.normal(ks, (n_head, hd), dtype=jnp.float32) * xav

    out = relative_multi_head_attn(x, mask, qkv_weight, r_r_bias, r_w_bias,
                                   n_head=n_head, scale=scale)
    out = jax.block_until_ready(out)
    ref = reference_forward(x, mask, qkv_weight, r_r_bias, r_w_bias,
                            n_head=n_head, scale=scale)
    assert out.shape == (B, L, D)
    assert bool(jnp.all(jnp.isfinite(out)))
    max_err = float(jnp.max(jnp.abs(out - ref)))
    assert bool(jnp.allclose(out, ref, atol=atol, rtol=rtol)), f"max err {max_err}"


if __name__ == "__main__":
    # small config (module toy sizes)
    _run_case(B=2, L=8, D=32, n_head=4, scale=False, n_pad=2,
              key=jax.random.PRNGKey(0), atol=2e-2, rtol=2e-2)
    # (8,128)-tile-sized config to validate the relative-shift math at real tiles
    _run_case(B=2, L=128, D=128, n_head=2, scale=True, n_pad=16,
              key=jax.random.PRNGKey(1), atol=3e-2, rtol=3e-2)
    print("KERNEL_OK")
</pallas_src>

<mosaic_0001>
module attributes {stable_mosaic.version = 11 : i64} {
  func.func @_attn_kernel(%arg0: i32, %arg1: memref<1x8x32xbf16, #tpu.memory_space<vmem>>, %arg2: memref<32x96xbf16, #tpu.memory_space<vmem>>, %arg3: memref<8x8xf32, #tpu.memory_space<vmem>>, %arg4: memref<4x8xf32, #tpu.memory_space<vmem>>, %arg5: memref<4x8xf32, #tpu.memory_space<vmem>>, %arg6: memref<1x1x8xf32, #tpu.memory_space<vmem>>, %arg7: memref<1x8x32xf32, #tpu.memory_space<vmem>>) attributes {dimension_semantics = [#tpu.dimension_semantics<parallel>], iteration_bounds = array<i64: 2>, scalar_prefetch = 0 : i64, scratch_operands = 0 : i64, tpu.core_type = #tpu.core_type<tc>, window_params = [{transform_indices = @transform_0, window_bounds = array<i64: 1, 8, 32>}, {pipeline_mode = #tpu.pipeline_mode<synchronous>, transform_indices = @transform_1, window_bounds = array<i64: 32, 96>}, {pipeline_mode = #tpu.pipeline_mode<synchronous>, transform_indices = @transform_2, window_bounds = array<i64: 8, 8>}, {pipeline_mode = #tpu.pipeline_mode<synchronous>, transform_indices = @transform_3, window_bounds = array<i64: 4, 8>}, {pipeline_mode = #tpu.pipeline_mode<synchronous>, transform_indices = @transform_4, window_bounds = array<i64: 4, 8>}, {transform_indices = @transform_5, window_bounds = array<i64: 1, 1, 8>}, {transform_indices = @transform_6, window_bounds = array<i64: 1, 8, 32>}]} {
    %c0 = arith.constant 0 : index
    %c0_0 = arith.constant 0 : index
    %c0_1 = arith.constant 0 : index
    %0 = vector.load %arg1[%c0, %c0_0, %c0_1] : memref<1x8x32xbf16, #tpu.memory_space<vmem>>, vector<1x8x32xbf16>
    %1 = vector.shape_cast %0 : vector<1x8x32xbf16> to vector<8x32xbf16>
    %c0_2 = arith.constant 0 : index
    %c0_3 = arith.constant 0 : index
    %2 = vector.load %arg2[%c0_2, %c0_3] : memref<32x96xbf16, #tpu.memory_space<vmem>>, vector<32x96xbf16>
    %cst = arith.constant dense<0.000000e+00> : vector<8x96xf32>
    %3 = tpu.matmul %1, %2, %cst {dimension_numbers = #tpu.dot_dimension_numbers<[1], [0], [0], [1], [0, 0, 1, 1], [], []>} : vector<8x32xbf16>, vector<32x96xbf16>, vector<8x96xf32> -> vector<8x96xf32>
    %c0_4 = arith.constant 0 : index
    %c0_5 = arith.constant 0 : index
    %4 = vector.load %arg3[%c0_4, %c0_5] : memref<8x8xf32, #tpu.memory_space<vmem>>, vector<8x8xf32>
    %5 = vector.extract_strided_slice %4 {offsets = [0, 0], sizes = [8, 4], strides = [1, 1]} : vector<8x8xf32> to vector<8x4xf32>
    %6 = vector.extract_strided_slice %4 {offsets = [0, 4], sizes = [8, 4], strides = [1, 1]} : vector<8x8xf32> to vector<8x4xf32>
    %7 = arith.truncf %4 : vector<8x8xf32> to vector<8x8xbf16>
    %c0_6 = arith.constant 0 : index
    %c0_7 = arith.constant 0 : index
    %8 = vector.load %arg4[%c0_6, %c0_7] : memref<4x8xf32, #tpu.memory_space<vmem>>, vector<4x8xf32>
    %c0_8 = arith.constant 0 : index
    %c0_9 = arith.constant 0 : index
    %9 = vector.load %arg5[%c0_8, %c0_9] : memref<4x8xf32, #tpu.memory_space<vmem>>, vector<4x8xf32>
    %c0_10 = arith.constant 0 : index
    %c0_11 = arith.constant 0 : index
    %c0_12 = arith.constant 0 : index
    %10 = vector.load %arg6[%c0_10, %c0_11, %c0_12] : memref<1x1x8xf32, #tpu.memory_space<vmem>>, vector<1x1x8xf32>
    %11 = vector.shape_cast %10 : vector<1x1x8xf32> to vector<1x8xf32>
    %12 = vector.extract_strided_slice %3 {offsets = [0, 0], sizes = [8, 8], strides = [1, 1]} : vector<8x96xf32> to vector<8x8xf32>
    %13 = vector.extract_strided_slice %3 {offsets = [0, 32], sizes = [8, 8], strides = [1, 1]} : vector<8x96xf32> to vector<8x8xf32>
    %14 = vector.extract_strided_slice %3 {offsets = [0, 64], sizes = [8, 8], strides = [1, 1]} : vector<8x96xf32> to vector<8x8xf32>
    %15 = arith.truncf %13 : vector<8x8xf32> to vector<8x8xbf16>
    %16 = vector.extract_strided_slice %8 {offsets = [0, 0], sizes = [1, 8], strides = [1, 1]} : vector<4x8xf32> to vector<1x8xf32>
    %17 = vector.broadcast %16 : vector<1x8xf32> to vector<8x8xf32>
    %18 = arith.addf %12, %17 : vector<8x8xf32>
    %19 = arith.truncf %18 : vector<8x8xf32> to vector<8x8xbf16>
    %cst_13 = arith.constant dense<0.000000e+00> : vector<8x8xf32>
    %20 = tpu.matmul %19, %15, %cst_13 {dimension_numbers = #tpu.dot_dimension_numbers<[1], [1], [0], [0], [0, 0, 1, 0], [], []>} : vector<8x8xbf16>, vector<8x8xbf16>, vector<8x8xf32> -> vector<8x8xf32>
    %21 = vector.extract_strided_slice %9 {offsets = [0, 0], sizes = [1, 8], strides = [1, 1]} : vector<4x8xf32> to vector<1x8xf32>
    %22 = vector.broadcast %21 : vector<1x8xf32> to vector<8x8xf32>
    %23 = arith.addf %12, %22 : vector<8x8xf32>
    %24 = vector.extract_strided_slice %23 {offsets = [0, 0], sizes = [8, 4], strides = [1, 1]} : vector<8x8xf32> to vector<8x4xf32>
    %25 = vector.extract_strided_slice %23 {offsets = [0, 4], sizes = [8, 4], strides = [1, 1]} : vector<8x8xf32> to vector<8x4xf32>
    %26 = arith.mulf %24, %6 : vector<8x4xf32>
    %27 = arith.mulf %25, %5 : vector<8x4xf32>
    %28 = arith.addf %26, %27 : vector<8x4xf32>
    %29 = arith.mulf %25, %6 : vector<8x4xf32>
    %30 = arith.mulf %24, %5 : vector<8x4xf32>
    %31 = arith.subf %29, %30 : vector<8x4xf32>
    %32 = tpu.concatenate %28, %31 in 1 : vector<8x4xf32>, vector<8x4xf32> -> vector<8x8xf32>
    %33 = arith.truncf %32 : vector<8x8xf32> to vector<8x8xbf16>
    %cst_14 = arith.constant dense<0.000000e+00> : vector<8x8xf32>
    %34 = tpu.matmul %33, %7, %cst_14 {dimension_numbers = #tpu.dot_dimension_numbers<[1], [1], [0], [0], [0, 0, 1, 0], [], []>} : vector<8x8xbf16>, vector<8x8xbf16>, vector<8x8xf32> -> vector<8x8xf32>
    %35 = vector.extract_strided_slice %13 {offsets = [0, 0], sizes = [8, 4], strides = [1, 1]} : vector<8x8xf32> to vector<8x4xf32>
    %36 = vector.extract_strided_slice %13 {offsets = [0, 4], sizes = [8, 4], strides = [1, 1]} : vector<8x8xf32> to vector<8x4xf32>
    %37 = arith.mulf %35, %6 : vector<8x4xf32>
    %38 = arith.mulf %36, %5 : vector<8x4xf32>
    %39 = arith.addf %37, %38 : vector<8x4xf32>
    %40 = arith.mulf %36, %6 : vector<8x4xf32>
    %41 = arith.mulf %35, %5 : vector<8x4xf32>
    %42 = arith.subf %40, %41 : vector<8x4xf32>
    %43 = tpu.concatenate %39, %42 in 1 : vector<8x4xf32>, vector<8x4xf32> -> vector<8x8xf32>
    %44 = arith.truncf %43 : vector<8x8xf32> to vector<8x8xbf16>
    %cst_15 = arith.constant dense<0.000000e+00> : vector<8x8xf32>
    %45 = tpu.matmul %7, %44, %cst_15 {dimension_numbers = #tpu.dot_dimension_numbers<[1], [1], [0], [0], [0, 0, 1, 0], [], []>} : vector<8x8xbf16>, vector<8x8xbf16>, vector<8x8xf32> -> vector<8x8xf32>
    %46 = arith.addf %20, %34 : vector<8x8xf32>
    %47 = arith.addf %46, %45 : vector<8x8xf32>
    %cst_16 = arith.constant 1.000000e+00 : f32
    %48 = vector.broadcast %cst_16 : f32 to vector<8x8xf32>
    %49 = arith.mulf %47, %48 : vector<8x8xf32>
    %50 = vector.broadcast %11 : vector<1x8xf32> to vector<8x8xf32>
    %51 = arith.addf %49, %50 : vector<8x8xf32>
    %cst_17 = arith.constant dense<0xFF800000> : vector<8xf32>
    %52 = vector.multi_reduction <maximumf>, %51, %cst_17 [1] : vector<8x8xf32> to vector<8xf32>
    %53 = vector.shape_cast %52 : vector<8xf32> to vector<8x1xf32>
    %54 = vector.broadcast %53 : vector<8x1xf32> to vector<8x8xf32>
    %55 = arith.subf %51, %54 : vector<8x8xf32>
    %56 = math.exp %55 : vector<8x8xf32>
    %cst_18 = arith.constant dense<0.000000e+00> : vector<8xf32>
    %57 = vector.multi_reduction <add>, %56, %cst_18 [1] : vector<8x8xf32> to vector<8xf32>
    %58 = vector.shape_cast %57 : vector<8xf32> to vector<8x1xf32>
    %59 = tpu.reciprocal %58 {approx = true} : vector<8x1xf32> -> vector<8x1xf32>
    %60 = vector.broadcast %59 : vector<8x1xf32> to vector<8x8xf32>
    %61 = arith.mulf %56, %60 : vector<8x8xf32>
    %62 = arith.truncf %61 : vector<8x8xf32> to vector<8x8xbf16>
    %63 = arith.truncf %14 : vector<8x8xf32> to vector<8x8xbf16>
    %cst_19 = arith.constant dense<0.000000e+00> : vector<8x8xf32>
    %64 = tpu.matmul %62, %63, %cst_19 {dimension_numbers = #tpu.dot_dimension_numbers<[1], [0], [0], [1], [0, 0, 1, 1], [], []>} : vector<8x8xbf16>, vector<8x8xbf16>, vector<8x8xf32> -> vector<8x8xf32>
    %65 = vector.extract_strided_slice %3 {offsets = [0, 8], sizes = [8, 8], strides = [1, 1]} : vector<8x96xf32> to vector<8x8xf32>
    %66 = vector.extract_strided_slice %3 {offsets = [0, 40], sizes = [8, 8], strides = [1, 1]} : vector<8x96xf32> to vector<8x8xf32>
    %67 = vector.extract_strided_slice %3 {offsets = [0, 72], sizes = [8, 8], strides = [1, 1]} : vector<8x96xf32> to vector<8x8xf32>
    %68 = arith.truncf %66 : vector<8x8xf32> to vector<8x8xbf16>
    %69 = vector.extract_strided_slice %8 {offsets = [1, 0], sizes = [1, 8], strides = [1, 1]} : vector<4x8xf32> to vector<1x8xf32>
    %70 = vector.broadcast %69 : vector<1x8xf32> to vector<8x8xf32>
    %71 = arith.addf %65, %70 : vector<8x8xf32>
    %72 = arith.truncf %71 : vector<8x8xf32> to vector<8x8xbf16>
    %cst_20 = arith.constant dense<0.000000e+00> : vector<8x8xf32>
    %73 = tpu.matmul %72, %68, %cst_20 {dimension_numbers = #tpu.dot_dimension_numbers<[1], [1], [0], [0], [0, 0, 1, 0], [], []>} : vector<8x8xbf16>, vector<8x8xbf16>, vector<8x8xf32> -> vector<8x8xf32>
    %74 = vector.extract_strided_slice %9 {offsets = [1, 0], sizes = [1, 8], strides = [1, 1]} : vector<4x8xf32> to vector<1x8xf32>
    %75 = vector.broadcast %74 : vector<1x8xf32> to vector<8x8xf32>
    %76 = arith.addf %65, %75 : vector<8x8xf32>
    %77 = vector.extract_strided_slice %76 {offsets = [0, 0], sizes = [8, 4], strides = [1, 1]} : vector<8x8xf32> to vector<8x4xf32>
    %78 = vector.extract_strided_slice %76 {offsets = [0, 4], sizes = [8, 4], strides = [1, 1]} : vector<8x8xf32> to vector<8x4xf32>
    %79 = arith.mulf %77, %6 : vector<8x4xf32>
    %80 = arith.mulf %78, %5 : vector<8x4xf32>
    %81 = arith.addf %79, %80 : vector<8x4xf32>
    %82 = arith.mulf %78, %6 : vector<8x4xf32>
    %83 = arith.mulf %77, %5 : vector<8x4xf32>
    %84 = arith.subf %82, %83 : vector<8x4xf32>
    %85 = tpu.concatenate %81, %84 in 1 : vector<8x4xf32>, vector<8x4xf32> -> vector<8x8xf32>
    %86 = arith.truncf %85 : vector<8x8xf32> to vector<8x8xbf16>
    %cst_21 = arith.constant dense<0.000000e+00> : vector<8x8xf32>
    %87 = tpu.matmul %86, %7, %cst_21 {dimension_numbers = #tpu.dot_dimension_numbers<[1], [1], [0], [0], [0, 0, 1, 0], [], []>} : vector<8x8xbf16>, vector<8x8xbf16>, vector<8x8xf32> -> vector<8x8xf32>
    %88 = vector.extract_strided_slice %66 {offsets = [0, 0], sizes = [8, 4], strides = [1, 1]} : vector<8x8xf32> to vector<8x4xf32>
    %89 = vector.extract_strided_slice %66 {offsets = [0, 4], sizes = [8, 4], strides = [1, 1]} : vector<8x8xf32> to vector<8x4xf32>
    %90 = arith.mulf %88, %6 : vector<8x4xf32>
    %91 = arith.mulf %89, %5 : vector<8x4xf32>
    %92 = arith.addf %90, %91 : vector<8x4xf32>
    %93 = arith.mulf %89, %6 : vector<8x4xf32>
    %94 = arith.mulf %88, %5 : vector<8x4xf32>
    %95 = arith.subf %93, %94 : vector<8x4xf32>
    %96 = tpu.concatenate %92, %95 in 1 : vector<8x4xf32>, vector<8x4xf32> -> vector<8x8xf32>
    %97 = arith.truncf %96 : vector<8x8xf32> to vector<8x8xbf16>
    %cst_22 = arith.constant dense<0.000000e+00> : vector<8x8xf32>
    %98 = tpu.matmul %7, %97, %cst_22 {dimension_numbers = #tpu.dot_dimension_numbers<[1], [1], [0], [0], [0, 0, 1, 0], [], []>} : vector<8x8xbf16>, vector<8x8xbf16>, vector<8x8xf32> -> vector<8x8xf32>
    %99 = arith.addf %73, %87 : vector<8x8xf32>
    %100 = arith.addf %99, %98 : vector<8x8xf32>
    %cst_23 = arith.constant 1.000000e+00 : f32
    %101 = vector.broadcast %cst_23 : f32 to vector<8x8xf32>
    %102 = arith.mulf %100, %101 : vector<8x8xf32>
    %103 = vector.broadcast %11 : vector<1x8xf32> to vector<8x8xf32>
    %104 = arith.addf %102, %103 : vector<8x8xf32>
    %cst_24 = arith.constant dense<0xFF800000> : vector<8xf32>
    %105 = vector.multi_reduction <maximumf>, %104, %cst_24 [1] : vector<8x8xf32> to vector<8xf32>
    %106 = vector.shape_cast %105 : vector<8xf32> to vector<8x1xf32>
    %107 = vector.broadcast %106 : vector<8x1xf32> to vector<8x8xf32>
    %108 = arith.subf %104, %107 : vector<8x8xf32>
    %109 = math.exp %108 : vector<8x8xf32>
    %cst_25 = arith.constant dense<0.000000e+00> : vector<8xf32>
    %110 = vector.multi_reduction <add>, %109, %cst_25 [1] : vector<8x8xf32> to vector<8xf32>
    %111 = vector.shape_cast %110 : vector<8xf32> to vector<8x1xf32>
    %112 = tpu.reciprocal %111 {approx = true} : vector<8x1xf32> -> vector<8x1xf32>
    %113 = vector.broadcast %112 : vector<8x1xf32> to vector<8x8xf32>
    %114 = arith.mulf %109, %113 : vector<8x8xf32>
    %115 = arith.truncf %114 : vector<8x8xf32> to vector<8x8xbf16>
    %116 = arith.truncf %67 : vector<8x8xf32> to vector<8x8xbf16>
    %cst_26 = arith.constant dense<0.000000e+00> : vector<8x8xf32>
    %117 = tpu.matmul %115, %116, %cst_26 {dimension_numbers = #tpu.dot_dimension_numbers<[1], [0], [0], [1], [0, 0, 1, 1], [], []>} : vector<8x8xbf16>, vector<8x8xbf16>, vector<8x8xf32> -> vector<8x8xf32>
    %118 = vector.extract_strided_slice %3 {offsets = [0, 16], sizes = [8, 8], strides = [1, 1]} : vector<8x96xf32> to vector<8x8xf32>
    %119 = vector.extract_strided_slice %3 {offsets = [0, 48], sizes = [8, 8], strides = [1, 1]} : vector<8x96xf32> to vector<8x8xf32>
    %120 = vector.extract_strided_slice %3 {offsets = [0, 80], sizes = [8, 8], strides = [1, 1]} : vector<8x96xf32> to vector<8x8xf32>
    %121 = arith.truncf %119 : vector<8x8xf32> to vector<8x8xbf16>
    %122 = vector.extract_strided_slice %8 {offsets = [2, 0], sizes = [1, 8], strides = [1, 1]} : vector<4x8xf32> to vector<1x8xf32>
    %123 = vector.broadcast %122 : vector<1x8xf32> to vector<8x8xf32>
    %124 = arith.addf %118, %123 : vector<8x8xf32>
    %125 = arith.truncf %124 : vector<8x8xf32> to vector<8x8xbf16>
    %cst_27 = arith.constant dense<0.000000e+00> : vector<8x8xf32>
    %126 = tpu.matmul %125, %121, %cst_27 {dimension_numbers = #tpu.dot_dimension_numbers<[1], [1], [0], [0], [0, 0, 1, 0], [], []>} : vector<8x8xbf16>, vector<8x8xbf16>, vector<8x8xf32> -> vector<8x8xf32>
    %127 = vector.extract_strided_slice %9 {offsets = [2, 0], sizes = [1, 8], strides = [1, 1]} : vector<4x8xf32> to vector<1x8xf32>
    %128 = vector.broadcast %127 : vector<1x8xf32> to vector<8x8xf32>
    %129 = arith.addf %118, %128 : vector<8x8xf32>
    %130 = vector.extract_strided_slice %129 {offsets = [0, 0], sizes = [8, 4], strides = [1, 1]} : vector<8x8xf32> to vector<8x4xf32>
    %131 = vector.extract_strided_slice %129 {offsets = [0, 4], sizes = [8, 4], strides = [1, 1]} : vector<8x8xf32> to vector<8x4xf32>
    %132 = arith.mulf %130, %6 : vector<8x4xf32>
    %133 = arith.mulf %131, %5 : vector<8x4xf32>
    %134 = arith.addf %132, %133 : vector<8x4xf32>
    %135 = arith.mulf %131, %6 : vector<8x4xf32>
    %136 = arith.mulf %130, %5 : vector<8x4xf32>
    %137 = arith.subf %135, %136 : vector<8x4xf32>
    %138 = tpu.concatenate %134, %137 in 1 : vector<8x4xf32>, vector<8x4xf32> -> vector<8x8xf32>
    %139 = arith.truncf %138 : vector<8x8xf32> to vector<8x8xbf16>
    %cst_28 = arith.constant dense<0.000000e+00> : vector<8x8xf32>
    %140 = tpu.matmul %139, %7, %cst_28 {dimension_numbers = #tpu.dot_dimension_numbers<[1], [1], [0], [0], [0, 0, 1, 0], [], []>} : vector<8x8xbf16>, vector<8x8xbf16>, vector<8x8xf32> -> vector<8x8xf32>
    %141 = vector.extract_strided_slice %119 {offsets = [0, 0], sizes = [8, 4], strides = [1, 1]} : vector<8x8xf32> to vector<8x4xf32>
    %142 = vector.extract_strided_slice %119 {offsets = [0, 4], sizes = [8, 4], strides = [1, 1]} : vector<8x8xf32> to vector<8x4xf32>
    %143 = arith.mulf %141, %6 : vector<8x4xf32>
    %144 = arith.mulf %142, %5 : vector<8x4xf32>
    %145 = arith.addf %143, %144 : vector<8x4xf32>
    %146 = arith.mulf %142, %6 : vector<8x4xf32>
    %147 = arith.mulf %141, %5 : vector<8x4xf32>
    %148 = arith.subf %146, %147 : vector<8x4xf32>
    %149 = tpu.concatenate %145, %148 in 1 : vector<8x4xf32>, vector<8x4xf32> -> vector<8x8xf32>
    %150 = arith.truncf %149 : vector<8x8xf32> to vector<8x8xbf16>
    %cst_29 = arith.constant dense<0.000000e+00> : vector<8x8xf32>
    %151 = tpu.matmul %7, %150, %cst_29 {dimension_numbers = #tpu.dot_dimension_numbers<[1], [1], [0], [0], [0, 0, 1, 0], [], []>} : vector<8x8xbf16>, vector<8x8xbf16>, vector<8x8xf32> -> vector<8x8xf32>
    %152 = arith.addf %126, %140 : vector<8x8xf32>
    %153 = arith.addf %152, %151 : vector<8x8xf32>
    %cst_30 = arith.constant 1.000000e+00 : f32
    %154 = vector.broadcast %cst_30 : f32 to vector<8x8xf32>
    %155 = arith.mulf %153, %154 : vector<8x8xf32>
    %156 = vector.broadcast %11 : vector<1x8xf32> to vector<8x8xf32>
    %157 = arith.addf %155, %156 : vector<8x8xf32>
    %cst_31 = arith.constant dense<0xFF800000> : vector<8xf32>
    %158 = vector.multi_reduction <maximumf>, %157, %cst_31 [1] : vector<8x8xf32> to vector<8xf32>
    %159 = vector.shape_cast %158 : vector<8xf32> to vector<8x1xf32>
    %160 = vector.broadcast %159 : vector<8x1xf32> to vector<8x8xf32>
    %161 = arith.subf %157, %160 : vector<8x8xf32>
    %162 = math.exp %161 : vector<8x8xf32>
    %cst_32 = arith.constant dense<0.000000e+00> : vector<8xf32>
    %163 = vector.multi_reduction <add>, %162, %cst_32 [1] : vector<8x8xf32> to vector<8xf32>
    %164 = vector.shape_cast %163 : vector<8xf32> to vector<8x1xf32>
    %165 = tpu.reciprocal %164 {approx = true} : vector<8x1xf32> -> vector<8x1xf32>
    %166 = vector.broadcast %165 : vector<8x1xf32> to vector<8x8xf32>
    %167 = arith.mulf %162, %166 : vector<8x8xf32>
    %168 = arith.truncf %167 : vector<8x8xf32> to vector<8x8xbf16>
    %169 = arith.truncf %120 : vector<8x8xf32> to vector<8x8xbf16>
    %cst_33 = arith.constant dense<0.000000e+00> : vector<8x8xf32>
    %170 = tpu.matmul %168, %169, %cst_33 {dimension_numbers = #tpu.dot_dimension_numbers<[1], [0], [0], [1], [0, 0, 1, 1], [], []>} : vector<8x8xbf16>, vector<8x8xbf16>, vector<8x8xf32> -> vector<8x8xf32>
    %171 = vector.extract_strided_slice %3 {offsets = [0, 24], sizes = [8, 8], strides = [1, 1]} : vector<8x96xf32> to vector<8x8xf32>
    %172 = vector.extract_strided_slice %3 {offsets = [0, 56], sizes = [8, 8], strides = [1, 1]} : vector<8x96xf32> to vector<8x8xf32>
    %173 = vector.extract_strided_slice %3 {offsets = [0, 88], sizes = [8, 8], strides = [1, 1]} : vector<8x96xf32> to vector<8x8xf32>
    %174 = arith.truncf %172 : vector<8x8xf32> to vector<8x8xbf16>
    %175 = vector.extract_strided_slice %8 {offsets = [3, 0], sizes = [1, 8], strides = [1, 1]} : vector<4x8xf32> to vector<1x8xf32>
    %176 = vector.broadcast %175 : vector<1x8xf32> to vector<8x8xf32>
    %177 = arith.addf %171, %176 : vector<8x8xf32>
    %178 = arith.truncf %177 : vector<8x8xf32> to vector<8x8xbf16>
    %cst_34 = arith.constant dense<0.000000e+00> : vector<8x8xf32>
    %179 = tpu.matmul %178, %174, %cst_34 {dimension_numbers = #tpu.dot_dimension_numbers<[1], [1], [0], [0], [0, 0, 1, 0], [], []>} : vector<8x8xbf16>, vector<8x8xbf16>, vector<8x8xf32> -> vector<8x8xf32>
    %180 = vector.extract_strided_slice %9 {offsets = [3, 0], sizes = [1, 8], strides = [1, 1]} : vector<4x8xf32> to vector<1x8xf32>
    %181 = vector.broadcast %180 : vector<1x8xf32> to vector<8x8xf32>
    %182 = arith.addf %171, %181 : vector<8x8xf32>
    %183 = vector.extract_strided_slice %182 {offsets = [0, 0], sizes = [8, 4], strides = [1, 1]} : vector<8x8xf32> to vector<8x4xf32>
    %184 = vector.extract_strided_slice %182 {offsets = [0, 4], sizes = [8, 4], strides = [1, 1]} : vector<8x8xf32> to vector<8x4xf32>
    %185 = arith.mulf %183, %6 : vector<8x4xf32>
    %186 = arith.mulf %184, %5 : vector<8x4xf32>
    %187 = arith.addf %185, %186 : vector<8x4xf32>
    %188 = arith.mulf %184, %6 : vector<8x4xf32>
    %189 = arith.mulf %183, %5 : vector<8x4xf32>
    %190 = arith.subf %188, %189 : vector<8x4xf32>
    %191 = tpu.concatenate %187, %190 in 1 : vector<8x4xf32>, vector<8x4xf32> -> vector<8x8xf32>
    %192 = arith.truncf %191 : vector<8x8xf32> to vector<8x8xbf16>
    %cst_35 = arith.constant dense<0.000000e+00> : vector<8x8xf32>
    %193 = tpu.matmul %192, %7, %cst_35 {dimension_numbers = #tpu.dot_dimension_numbers<[1], [1], [0], [0], [0, 0, 1, 0], [], []>} : vector<8x8xbf16>, vector<8x8xbf16>, vector<8x8xf32> -> vector<8x8xf32>
    %194 = vector.extract_strided_slice %172 {offsets = [0, 0], sizes = [8, 4], strides = [1, 1]} : vector<8x8xf32> to vector<8x4xf32>
    %195 = vector.extract_strided_slice %172 {offsets = [0, 4], sizes = [8, 4], strides = [1, 1]} : vector<8x8xf32> to vector<8x4xf32>
    %196 = arith.mulf %194, %6 : vector<8x4xf32>
    %197 = arith.mulf %195, %5 : vector<8x4xf32>
    %198 = arith.addf %196, %197 : vector<8x4xf32>
    %199 = arith.mulf %195, %6 : vector<8x4xf32>
    %200 = arith.mulf %194, %5 : vector<8x4xf32>
    %201 = arith.subf %199, %200 : vector<8x4xf32>
    %202 = tpu.concatenate %198, %201 in 1 : vector<8x4xf32>, vector<8x4xf32> -> vector<8x8xf32>
    %203 = arith.truncf %202 : vector<8x8xf32> to vector<8x8xbf16>
    %cst_36 = arith.constant dense<0.000000e+00> : vector<8x8xf32>
    %204 = tpu.matmul %7, %203, %cst_36 {dimension_numbers = #tpu.dot_dimension_numbers<[1], [1], [0], [0], [0, 0, 1, 0], [], []>} : vector<8x8xbf16>, vector<8x8xbf16>, vector<8x8xf32> -> vector<8x8xf32>
    %205 = arith.addf %179, %193 : vector<8x8xf32>
    %206 = arith.addf %205, %204 : vector<8x8xf32>
    %cst_37 = arith.constant 1.000000e+00 : f32
    %207 = vector.broadcast %cst_37 : f32 to vector<8x8xf32>
    %208 = arith.mulf %206, %207 : vector<8x8xf32>
    %209 = vector.broadcast %11 : vector<1x8xf32> to vector<8x8xf32>
    %210 = arith.addf %208, %209 : vector<8x8xf32>
    %cst_38 = arith.constant dense<0xFF800000> : vector<8xf32>
    %211 = vector.multi_reduction <maximumf>, %210, %cst_38 [1] : vector<8x8xf32> to vector<8xf32>
    %212 = vector.shape_cast %211 : vector<8xf32> to vector<8x1xf32>
    %213 = vector.broadcast %212 : vector<8x1xf32> to vector<8x8xf32>
    %214 = arith.subf %210, %213 : vector<8x8xf32>
    %215 = math.exp %214 : vector<8x8xf32>
    %cst_39 = arith.constant dense<0.000000e+00> : vector<8xf32>
    %216 = vector.multi_reduction <add>, %215, %cst_39 [1] : vector<8x8xf32> to vector<8xf32>
    %217 = vector.shape_cast %216 : vector<8xf32> to vector<8x1xf32>
    %218 = tpu.reciprocal %217 {approx = true} : vector<8x1xf32> -> vector<8x1xf32>
    %219 = vector.broadcast %218 : vector<8x1xf32> to vector<8x8xf32>
    %220 = arith.mulf %215, %219 : vector<8x8xf32>
    %221 = arith.truncf %220 : vector<8x8xf32> to vector<8x8xbf16>
    %222 = arith.truncf %173 : vector<8x8xf32> to vector<8x8xbf16>
    %cst_40 = arith.constant dense<0.000000e+00> : vector<8x8xf32>
    %223 = tpu.matmul %221, %222, %cst_40 {dimension_numbers = #tpu.dot_dimension_numbers<[1], [0], [0], [1], [0, 0, 1, 1], [], []>} : vector<8x8xbf16>, vector<8x8xbf16>, vector<8x8xf32> -> vector<8x8xf32>
    %224 = tpu.concatenate %64, %117, %170, %223 in 1 : vector<8x8xf32>, vector<8x8xf32>, vector<8x8xf32>, vector<8x8xf32> -> vector<8x32xf32>
    %c0_41 = arith.constant 0 : index
    %c0_42 = arith.constant 0 : index
    %c0_43 = arith.constant 0 : index
    %225 = vector.load %arg7[%c0_41, %c0_42, %c0_43] : memref<1x8x32xf32, #tpu.memory_space<vmem>>, vector<1x8x32xf32>
    %226 = vector.shape_cast %225 : vector<1x8x32xf32> to vector<8x32xf32>
    %227 = vector.shape_cast %224 : vector<8x32xf32> to vector<1x8x32xf32>
    tpu.vector_store %arg7[%c0_41, %c0_42, %c0_43], %227 {strides = array<i32>} : memref<1x8x32xf32, #tpu.memory_space<vmem>>, vector<1x8x32xf32>,
    return
  }
  func.func @transform_0(%arg0: i32) -> (i32, i32, i32) {
    %c0_i32 = arith.constant 0 : i32
    %c0_i32_0 = arith.constant 0 : i32
    %c0_i32_1 = arith.constant 0 : i32
    return %arg0, %c0_i32, %c0_i32_0 : i32, i32, i32
  }
  func.func @transform_1(%arg0: i32) -> (i32, i32) {
    %c0_i32 = arith.constant 0 : i32
    %c0_i32_0 = arith.constant 0 : i32
    %c0_i32_1 = arith.constant 0 : i32
    return %c0_i32, %c0_i32_0 : i32, i32
  }
  func.func @transform_2(%arg0: i32) -> (i32, i32) {
    %c0_i32 = arith.constant 0 : i32
    %c0_i32_0 = arith.constant 0 : i32
    %c0_i32_1 = arith.constant 0 : i32
    return %c0_i32, %c0_i32_0 : i32, i32
  }
  func.func @transform_3(%arg0: i32) -> (i32, i32) {
    %c0_i32 = arith.constant 0 : i32
    %c0_i32_0 = arith.constant 0 : i32
    %c0_i32_1 = arith.constant 0 : i32
    return %c0_i32, %c0_i32_0 : i32, i32
  }
  func.func @transform_4(%arg0: i32) -> (i32, i32) {
    %c0_i32 = arith.constant 0 : i32
    %c0_i32_0 = arith.constant 0 : i32
    %c0_i32_1 = arith.constant 0 : i32
    return %c0_i32, %c0_i32_0 : i32, i32
  }
  func.func @transform_5(%arg0: i32) -> (i32, i32, i32) {
    %c0_i32 = arith.constant 0 : i32
    %c0_i32_0 = arith.constant 0 : i32
    %c0_i32_1 = arith.constant 0 : i32
    return %arg0, %c0_i32, %c0_i32_0 : i32, i32, i32
  }
  func.func @transform_6(%arg0: i32) -> (i32, i32, i32) {
    %c0_i32 = arith.constant 0 : i32
    %c0_i32_0 = arith.constant 0 : i32
    %c0_i32_1 = arith.constant 0 : i32
    return %arg0, %c0_i32, %c0_i32_0 : i32, i32, i32
  }
}

</mosaic_0001>

<llo_original>
// kernel: tpu_custom_call.1
$region0: #{tpu_custom_call.1}
  #allocation0 [shape = 'u32[]', space=smem, size = 0x4, offset = 0x4, fixed_abs, tag = 'smem constant byte address 0x4 - core index']
  #allocation1 [shape = 'u32[72,128]{1,0:T(1,128)}', space=vmem, size = 0x9000, scoped, tag = 'internal scratch']
  %s0 = inlined_call_operand.hbm [shape: bf16[2,8,32], index: 0, kind: input, shape index: {}]
  %s1 = inlined_call_operand.hbm [shape: bf16[32,96], index: 1, kind: input, shape index: {}]
  %s2 = inlined_call_operand.hbm [shape: f32[8,8], index: 2, kind: input, shape index: {}]
  %s3 = inlined_call_operand.hbm [shape: f32[4,8], index: 3, kind: input, shape index: {}]
  %s4 = inlined_call_operand.hbm [shape: f32[4,8], index: 4, kind: input, shape index: {}]
  %s5 = inlined_call_operand.vmem [shape: f32[2,1,8], index: 5, kind: input, shape index: {}]
  %s6 = inlined_call_operand.hbm [shape: f32[2,8,32], index: 6, kind: output, shape index: {}]
  %s7 = sld [smem:[#allocation0]]
  $region77: #{tpu_custom_call.1} parent=0
    _
  %s9 = ssub.s32 1, %s7
  %s10 = scalar_select 0, %s9, %s7
  $region1: #{tpu_custom_call.1} parent=0
    #allocation2 [shape = 'u8[4096]{0}', space=vmem, size = 0x1000, scoped, tag = 'input window, operand 0']
    #allocation3 [shape = 's32[2]{0}', space=sflag, size = 0x8, scoped, tag = 'scoped memory for tpu_custom_call.1']
    #allocation4 [shape = 's32[2]{0}', space=sflag, size = 0x8, scoped, tag = 'scoped memory for tpu_custom_call.1']
    #allocation5 [shape = 'u8[8192]{0}', space=vmem, size = 0x2000, scoped, tag = 'input window, operand 1, single buffered']
    #allocation6 [shape = 's32[1]{0}', space=sflag, size = 0x4, scoped, tag = 'scoped memory for tpu_custom_call.1']
    #allocation7 [shape = 'u8[4096]{0}', space=vmem, size = 0x1000, scoped, tag = 'input window, operand 2, single buffered']
    #allocation8 [shape = 'u8[2048]{0}', space=vmem, size = 0x800, scoped, tag = 'input window, operand 3, single buffered']
    #allocation9 [shape = 's32[1]{0}', space=sflag, size = 0x4, scoped, tag = 'scoped memory for tpu_custom_call.1']
    #allocation10 [shape = 'u8[2048]{0}', space=vmem, size = 0x800, scoped, tag = 'input window, operand 4, single buffered']
    #allocation11 [shape = 'u8[8192]{0}', space=vmem, size = 0x2000, scoped, tag = 'output window, operand 0']
    %11 = vsyncpa [#allocation3], 0
    %s12 = scalar_lea.sflag [#allocation3], 1
    %13 = vsyncpa %s12, 0
    %14 = vsyncpa [#allocation6], 0
    %15 = vsyncpa [#allocation9], 0
    %16 = vsyncpa [#allocation4], 0
    %s17 = scalar_lea.sflag [#allocation4], 1
    %18 = vsyncpa %s17, 0
    loop: start=0, step=1, limit=4
    $region2: #{tpu_custom_call.1} parent=1 // loop_pre_header
      _
    $region3: #{tpu_custom_call.1} parent=1 // loop_header
      %s20 = sphi 0, %s24
      %p21 = scmp.ge.s32.totalorder %s20, 4
      %s30 = sphi 0, %s32
      %s33 = sphi 0, %s30
      %s34 = sphi 0, %s33
      %s50 = sphi 0, %s34
      %s54 = sphi 0, %s54
      %s56 = sphi 0, %s54
      %s57 = sphi 0, %s56
      %s71 = sphi 0, %s57
      %s75 = sphi 0, %s75
      %s77 = sphi 0, %s75
      %s78 = sphi 0, %s77
      %s92 = sphi 0, %s78
      %s96 = sphi 0, %s96
      %s98 = sphi 0, %s96
      %s99 = sphi 0, %s98
      %s113 = sphi 0, %s99
      %s117 = sphi 0, %s117
      %s119 = sphi 0, %s117
      %s120 = sphi 0, %s119
      %s134 = sphi 0, %s120
      %s140 = sphi 0, %s142
      %s143 = sphi 0, %s140
      %s144 = sphi 0, %s143
      %s160 = sphi 0, %s144
      %s166 = sphi 0, %s168
      %s169 = sphi 0, %s166
      %s170 = sphi 0, %s169
      %s186 = sphi 0, %s170
    $region4: #{tpu_custom_call.1} parent=1 // loop_header_branch
      %23 = sbr.rel (%p21) target = $region8
    $region5: #{tpu_custom_call.1} parent=1 // loop_body
      %s25 = ssub.s32 %s20, 1
      %s26 = ssub.s32 %s20, 2
      %s27 = sadd.s32 %s20, 1
      %s28 = ssub.s32 %s20, %s27
      %p29 = scmp.eq.s32.totalorder %s28, 0
      %s31 = sadd.s32 %s30, 1
      %s32 = scalar_select %p29, %s30, %s31
      %p35 = pneg %p29
      %p36 = scmp.eq.s32.totalorder %s20, 1
      %p37 = por %p35, %p36
      %p38 = scmp.ne.s32.totalorder %s30, %s33
      %p39 = scmp.eq.s32.totalorder %s20, 0
      %p40 = por %p38, %p39
      %p41 = scmp.ne.s32.totalorder %s30, %s33
      %p42 = scmp.eq.s32.totalorder %s25, 1
      %p43 = por %p41, %p42
      %p44 = scmp.ne.s32.totalorder %s33, %s34
      %p45 = scmp.eq.s32.totalorder %s25, 0
      %p46 = por %p44, %p45
      %p47 = scmp.ne.s32.totalorder %s33, %s34
      %p48 = scmp.eq.s32.totalorder %s26, 1
      %p49 = por %p47, %p48
      %p51 = scmp.ne.s32.totalorder %s34, %s50
      %p52 = scmp.eq.s32.totalorder %s26, 0
      %p53 = por %p51, %p52
      %s55 = sadd.s32 %s54, 1
      %p58 = scmp.eq.s32.totalorder %s20, 1
      %p59 = scmp.ne.s32.totalorder %s54, %s56
      %p60 = scmp.eq.s32.totalorder %s20, 0
      %p61 = por %p59, %p60
      %p62 = scmp.ne.s32.totalorder %s54, %s56
      %p63 = scmp.eq.s32.totalorder %s25, 1
      %p64 = por %p62, %p63
      %p65 = scmp.ne.s32.totalorder %s56, %s57
      %p66 = scmp.eq.s32.totalorder %s25, 0
      %p67 = por %p65, %p66
      %p68 = scmp.ne.s32.totalorder %s56, %s57
      %p69 = scmp.eq.s32.totalorder %s26, 1
      %p70 = por %p68, %p69
      %p72 = scmp.ne.s32.totalorder %s57, %s71
      %p73 = scmp.eq.s32.totalorder %s26, 0
      %p74 = por %p72, %p73
      %s76 = sadd.s32 %s75, 1
      %p79 = scmp.eq.s32.totalorder %s20, 1
      %p80 = scmp.ne.s32.totalorder %s75, %s77
      %p81 = scmp.eq.s32.totalorder %s20, 0
      %p82 = por %p80, %p81
      %p83 = scmp.ne.s32.totalorder %s75, %s77
      %p84 = scmp.eq.s32.totalorder %s25, 1
      %p85 = por %p83, %p84
      %p86 = scmp.ne.s32.totalorder %s77, %s78
      %p87 = scmp.eq.s32.totalorder %s25, 0
      %p88 = por %p86, %p87
      %p89 = scmp.ne.s32.totalorder %s77, %s78
      %p90 = scmp.eq.s32.totalorder %s26, 1
      %p91 = por %p89, %p90
      %p93 = scmp.ne.s32.totalorder %s78, %s92
      %p94 = scmp.eq.s32.totalorder %s26, 0
      %p95 = por %p93, %p94
      %s97 = sadd.s32 %s96, 1
      %p100 = scmp.eq.s32.totalorder %s20, 1
      %p101 = scmp.ne.s32.totalorder %s96, %s98
      %p102 = scmp.eq.s32.totalorder %s20, 0
      %p103 = por %p101, %p102
      %p104 = scmp.ne.s32.totalorder %s96, %s98
      %p105 = scmp.eq.s32.totalorder %s25, 1
      %p106 = por %p104, %p105
      %p107 = scmp.ne.s32.totalorder %s98, %s99
      %p108 = scmp.eq.s32.totalorder %s25, 0
      %p109 = por %p107, %p108
      %p110 = scmp.ne.s32.totalorder %s98, %s99
      %p111 = scmp.eq.s32.totalorder %s26, 1
      %p112 = por %p110, %p111
      %p114 = scmp.ne.s32.totalorder %s99, %s113
      %p115 = scmp.eq.s32.totalorder %s26, 0
      %p116 = por %p114, %p115
      %s118 = sadd.s32 %s117, 1
      %p121 = scmp.eq.s32.totalorder %s20, 1
      %p122 = scmp.ne.s32.totalorder %s117, %s119
      %p123 = scmp.eq.s32.totalorder %s20, 0
      %p124 = por %p122, %p123
      %p125 = scmp.ne.s32.totalorder %s117, %s119
      %p126 = scmp.eq.s32.totalorder %s25, 1
      %p127 = por %p125, %p126
      %p128 = scmp.ne.s32.totalorder %s119, %s120
      %p129 = scmp.eq.s32.totalorder %s25, 0
      %p130 = por %p128, %p129
      %p131 = scmp.ne.s32.totalorder %s119, %s120
      %p132 = scmp.eq.s32.totalorder %s26, 1
      %p133 = por %p131, %p132
      %p135 = scmp.ne.s32.totalorder %s120, %s134
      %p136 = scmp.eq.s32.totalorder %s26, 0
      %p137 = por %p135, %p136
      %s138 = ssub.s32 %s20, %s27
      %p139 = scmp.eq.s32.totalorder %s138, 0
      %s141 = sadd.s32 %s140, 1
      %s142 = scalar_select %p139, %s140, %s141
      %p145 = pneg %p139
      %p146 = scmp.eq.s32.totalorder %s20, 1
      %p147 = por %p145, %p146
      %p148 = scmp.ne.s32.totalorder %s140, %s143
      %p149 = scmp.eq.s32.totalorder %s20, 0
      %p150 = por %p148, %p149
      %p151 = scmp.ne.s32.totalorder %s140, %s143
      %p152 = scmp.eq.s32.totalorder %s25, 1
      %p153 = por %p151, %p152
      %p154 = scmp.ne.s32.totalorder %s143, %s144
      %p155 = scmp.eq.s32.totalorder %s25, 0
      %p156 = por %p154, %p155
      %p157 = scmp.ne.s32.totalorder %s143, %s144
      %p158 = scmp.eq.s32.totalorder %s26, 1
      %p159 = por %p157, %p158
      %p161 = scmp.ne.s32.totalorder %s144, %s160
      %p162 = scmp.eq.s32.totalorder %s26, 0
      %p163 = por %p161, %p162
      %s164 = ssub.s32 %s20, %s27
      %p165 = scmp.eq.s32.totalorder %s164, 0
      %s167 = sadd.s32 %s166, 1
      %s168 = scalar_select %p165, %s166, %s167
      %p171 = pneg %p165
      %p172 = scmp.eq.s32.totalorder %s20, 1
      %p173 = por %p171, %p172
      %p174 = scmp.ne.s32.totalorder %s166, %s169
      %p175 = scmp.eq.s32.totalorder %s20, 0
      %p176 = por %p174, %p175
      %p177 = scmp.ne.s32.totalorder %s166, %s169
      %p178 = scmp.eq.s32.totalorder %s25, 1
      %p179 = por %p177, %p178
      %p180 = scmp.ne.s32.totalorder %s169, %s170
      %p181 = scmp.eq.s32.totalorder %s25, 0
      %p182 = por %p180, %p181
      %p183 = scmp.ne.s32.totalorder %s169, %s170
      %p184 = scmp.eq.s32.totalorder %s26, 1
      %p185 = por %p183, %p184
      %p187 = scmp.ne.s32.totalorder %s170, %s186
      %p188 = scmp.eq.s32.totalorder %s26, 0
      %p189 = por %p187, %p188
      %p190 = scmp.le.s32.totalorder 1, %s20
      %p191 = scmp.lt.s32.totalorder %s20, 3
      %p192 = pnand %p190, %p191
      %p193 = pneg %p192
      // Predicated region
      $region9: #{tpu_custom_call.1} parent=5 // pred_check
        _
      $region10: #{tpu_custom_call.1} parent=5 // pred_check_branch
        %195 = sbr.rel (%p192) target = $region12
      $region11: #{tpu_custom_call.1} parent=5 // pred_region
        %s196 = ssub.s32 %s20, 1
        // Predicated region
        $region13: #{tpu_custom_call.1} parent=11 // pred_check
          %p197 = pneg %p67
        $region14: #{tpu_custom_call.1} parent=11 // pred_check_branch
          %199 = sbr.rel (%p197) target = $region16
        $region15: #{tpu_custom_call.1} parent=11 // pred_region
          %201 = vsyncadd [#allocation6], 0
          %s202 = sshll.u32 %s1, 4
          %s203 = int_to_ptr.hbm [resolvable:$true] %s202
          %s204 = sshll.u32 [#allocation5], 4
          %s205 = int_to_ptr.vmem [resolvable:$true] %s204
          %210 = dma.hbm_to_vmem [thread:$0]  %s203, 256, %s205, [#allocation6], 64, 64, 4
        $region16: #{tpu_custom_call.1} parent=11 // pred_fallthru
          _
        // Predicated region
        $region17: #{tpu_custom_call.1} parent=11 // pred_check
          %p211 = pneg %p88
        $region18: #{tpu_custom_call.1} parent=11 // pred_check_branch
          %213 = sbr.rel (%p211) target = $region20
        $region19: #{tpu_custom_call.1} parent=11 // pred_region
          %215 = vsyncadd [#allocation6], 0
          %s217 = sshll.u32 %s2, 4
          %s218 = int_to_ptr.hbm [resolvable:$true] %s217
          %s219 = sshll.u32 [#allocation7], 4
          %s220 = int_to_ptr.vmem [resolvable:$true] %s219
          %222 = dma.hbm_to_vmem [thread:$0]  %s218, 128, %s220, [#allocation6]
        $region20: #{tpu_custom_call.1} parent=11 // pred_fallthru
          _
        // Predicated region
        $region21: #{tpu_custom_call.1} parent=11 // pred_check
          %p223 = pneg %p109
        $region22: #{tpu_custom_call.1} parent=11 // pred_check_branch
          %225 = sbr.rel (%p223) target = $region24
        $region23: #{tpu_custom_call.1} parent=11 // pred_region
          %227 = vsyncadd [#allocation9], 0
          %s229 = sshll.u32 %s3, 4
          %s230 = int_to_ptr.hbm [resolvable:$true] %s229
          %s231 = sshll.u32 [#allocation8], 4
          %s232 = int_to_ptr.vmem [resolvable:$true] %s231
          %234 = dma.hbm_to_vmem [thread:$0]  %s230, 64, %s232, [#allocation9]
        $region24: #{tpu_custom_call.1} parent=11 // pred_fallthru
          _
        // Predicated region
        $region25: #{tpu_custom_call.1} parent=11 // pred_check
          %p235 = pneg %p130
        $region26: #{tpu_custom_call.1} parent=11 // pred_check_branch
          %237 = sbr.rel (%p235) target = $region28
        $region27: #{tpu_custom_call.1} parent=11 // pred_region
          %239 = vsyncadd [#allocation9], 0
          %s241 = sshll.u32 %s4, 4
          %s242 = int_to_ptr.hbm [resolvable:$true] %s241
          %s243 = sshll.u32 [#allocation10], 4
          %s244 = int_to_ptr.vmem [resolvable:$true] %s243
          %246 = dma.hbm_to_vmem [thread:$0]  %s242, 64, %s244, [#allocation9]
        $region28: #{tpu_custom_call.1} parent=11 // pred_fallthru
          _
      $region12: #{tpu_custom_call.1} parent=5 // pred_fallthru
        _
      %p247 = scmp.lt.s32.totalorder %s20, 2
      // Predicated region
      $region29: #{tpu_custom_call.1} parent=5 // pred_check
        %p248 = pneg %p247
      $region30: #{tpu_custom_call.1} parent=5 // pred_check_branch
        %250 = sbr.rel (%p248) target = $region32
      $region31: #{tpu_custom_call.1} parent=5 // pred_region
        // Predicated region
        $region33: #{tpu_custom_call.1} parent=31 // pred_check
          %p251 = pneg %p40
        $region34: #{tpu_custom_call.1} parent=31 // pred_check_branch
          %253 = sbr.rel (%p251) target = $region36
        $region35: #{tpu_custom_call.1} parent=31 // pred_region
          %s254 = sand.u32 %s30, 1
          %s255 = scalar_lea.sflag [#allocation3], %s254
          %s256 = sand.u32 %s30, 1
          %s257 = smul.addr %s256, 4
          %s258 = scalar_lea.vmem [#allocation2], %s257
          %260 = vsyncadd %s255, 0
          %s261 = smul.addr %s20, 4
          %s262 = scalar_lea.hbm %s0, %s261
          %s264 = sshll.u32 %s262, 4
          %s265 = int_to_ptr.hbm [resolvable:$true] %s264
          %s266 = sshll.u32 %s258, 4
          %s267 = int_to_ptr.vmem [resolvable:$true] %s266
          %269 = dma.hbm_to_vmem [thread:$0]  %s265, 64, %s267, %s255
        $region36: #{tpu_custom_call.1} parent=31 // pred_fallthru
          _
        // Predicated region
        $region37: #{tpu_custom_call.1} parent=31 // pred_check
          %p270 = pneg %p150
        $region38: #{tpu_custom_call.1} parent=31 // pred_check_branch
          %272 = sbr.rel (%p270) target = $region40
        $region39: #{tpu_custom_call.1} parent=31 // pred_region
          %p273 = scmp.lt.s32.totalorder %s20, 1
          %s274 = scalar_select %p273, %s20, 1
          %s275 = scalar_lea.vmem %s5, %s274
        $region40: #{tpu_custom_call.1} parent=31 // pred_fallthru
          _
      $region32: #{tpu_custom_call.1} parent=5 // pred_fallthru
        _
      %p276 = scmp.le.s32.totalorder 1, %s20
      %p277 = scmp.lt.s32.totalorder %s20, 3
      %p278 = pnand %p276, %p277
      %p279 = pneg %p278
      // Predicated region
      $region41: #{tpu_custom_call.1} parent=5 // pred_check
        _
      $region42: #{tpu_custom_call.1} parent=5 // pred_check_branch
        %281 = sbr.rel (%p278) target = $region44
      $region43: #{tpu_custom_call.1} parent=5 // pred_region
        %s282 = ssub.s32 %s20, 1
        %s283 = sand.u32 %s33, 1
        %s284 = scalar_lea.sflag [#allocation3], %s283
        %s285 = sand.u32 %s33, 1
        %s286 = smul.addr %s285, 4
        %s287 = scalar_lea.vmem [#allocation2], %s286
        // Predicated region
        $region45: #{tpu_custom_call.1} parent=43 // pred_check
          %p288 = pneg %p46
        $region46: #{tpu_custom_call.1} parent=43 // pred_check_branch
          %290 = sbr.rel (%p288) target = $region48
        $region47: #{tpu_custom_call.1} parent=43 // pred_region
          %292 = dma.done %s284, 64
        $region48: #{tpu_custom_call.1} parent=43 // pred_fallthru
          _
        // Predicated region
        $region49: #{tpu_custom_call.1} parent=43 // pred_check
          %p293 = pneg %p67
        $region50: #{tpu_custom_call.1} parent=43 // pred_check_branch
          %295 = sbr.rel (%p293) target = $region52
        $region51: #{tpu_custom_call.1} parent=43 // pred_region
          %297 = dma.done [#allocation6], 256
        $region52: #{tpu_custom_call.1} parent=43 // pred_fallthru
          _
        // Predicated region
        $region53: #{tpu_custom_call.1} parent=43 // pred_check
          %p298 = pneg %p88
        $region54: #{tpu_custom_call.1} parent=43 // pred_check_branch
          %300 = sbr.rel (%p298) target = $region56
        $region55: #{tpu_custom_call.1} parent=43 // pred_region
          %302 = dma.done [#allocation6], 128
        $region56: #{tpu_custom_call.1} parent=43 // pred_fallthru
          _
        // Predicated region
        $region57: #{tpu_custom_call.1} parent=43 // pred_check
          %p303 = pneg %p109
        $region58: #{tpu_custom_call.1} parent=43 // pred_check_branch
          %305 = sbr.rel (%p303) target = $region60
        $region59: #{tpu_custom_call.1} parent=43 // pred_region
          %307 = dma.done [#allocation9], 64
        $region60: #{tpu_custom_call.1} parent=43 // pred_fallthru
          _
        // Predicated region
        $region61: #{tpu_custom_call.1} parent=43 // pred_check
          %p308 = pneg %p130
        $region62: #{tpu_custom_call.1} parent=43 // pred_check_branch
          %310 = sbr.rel (%p308) target = $region64
        $region63: #{tpu_custom_call.1} parent=43 // pred_region
          %312 = dma.done [#allocation9], 64
        $region64: #{tpu_custom_call.1} parent=43 // pred_fallthru
          _
        %s313 = sand.u32 %s33, 1
        %s314 = scalar_lea.sflag [#allocation3], %s313
        %s315 = sand.u32 %s33, 1
        %s316 = smul.addr %s315, 4
        %s317 = scalar_lea.vmem [#allocation2], %s316
        %p318 = pneg %p46
        %p319 = pneg %p43
        %p320 = pneg %p67
        %p321 = pneg %p64
        %p322 = pneg %p88
        %p323 = pneg %p85
        %p324 = pneg %p109
        %p325 = pneg %p106
        %p326 = pneg %p130
        %p327 = pneg %p127
        %p328 = scmp.lt.s32.totalorder %s25, 1
        %s329 = scalar_select %p328, %s25, 1
        %s330 = scalar_lea.vmem %s5, %s329
        %p331 = pneg %p156
        %p332 = pneg %p153
        %p333 = pneg %p182
        %p334 = pneg %p179
        %s335 = sand.u32 %s169, 1
        %s336 = scalar_lea.sflag [#allocation4], %s335
        %s337 = sand.u32 %s169, 1
        %s338 = smul.addr %s337, 8
        %s339 = scalar_lea.vmem [#allocation11], %s338
        %p340 = scmp.lt.s32.totalorder %s25, 1
        %s341 = scalar_select %p340, %s25, 1
        %s342 = scalar_lea.vmem %s5, %s341
        %v344 = vld [vmem:[%s287] sm:$0xf]
        %v345 = vld [vmem:[#allocation5] sm:$0xf]
        %v346 = vld [vmem:[#allocation5 + $0x4] sm:$0xf]
        %v347 = vld [vmem:[#allocation5 + $0x8] sm:$0xf]
        %v348 = vld [vmem:[#allocation5 + $0xc] sm:$0xf]
        %v353 = vunpack.c.l.b16 %v345
        %v354 = vunpack.c.l.b16 %v346
        %v355 = vunpack.c.l.b16 %v347
        %v356 = vunpack.c.l.b16 %v348
        %v357 = vpack.c.b16 %v354, %v353
        %v358 = vpack.c.b16 %v356, %v355
        %vm361 = vcmask 261120
        %v363 = vsel %vm361, %v344, 0
        %365 = vmatpush.bf16.msra.mxu0 0
        %366 = vmatpush.bf16.msra.mxu0 0
        %367 = vmatpush.bf16.msra.mxu0 0
        %368 = vmatpush.bf16.msra.mxu0 0
        %369 = vmatpush.bf16.msra.mxu0 0
        %370 = vmatpush.bf16.msra.mxu0 0
        %371 = vmatpush.bf16.msra.mxu0 %v358
        %372 = vmatpush.bf16.msra.mxu0 %v357
        %373 = vmatmul.bf16.gmra.mxu0 %v363
        %v374 = vpop.f32.mrf.mxu0
        %v375 = vadd.f32 0.0, %v374
        %v376 = vpop.f32.mrf.mxu0
        %377 = vdwg.mxu0
        %v378 = vld [vmem:[#allocation7] sm:$0xff]
        %v379 = vpack.c.bf16 %v378, %v378
        %v380 = vld [vmem:[#allocation8] sm:$0xf]
        %v381 = vld [vmem:[#allocation10] sm:$0xf]
        %v382 = vld [vmem:[%s342] sm:$0x1]
        %v383 = vpack.c.bf16 %v375, %v375
        %v384 = vperm.slane %v380, 0
        %v385 = vadd.f32 %v375, %v384
        %v386 = vpack.c.bf16 %v385, %v385
        %v387 = vperm.slane %v381, 0
        %v388 = vadd.f32 %v375, %v387
        %390 = vrot.lane.b32.xlu0 %v378, 124
        %v391 = vpop.permute.xlu0 %390
        %v393 = vmul.f32 %v388, %v391
        %394 = vrot.lane.b32.xlu0 %v378, 4
        %v395 = vpop.permute.xlu0 %394
        %v397 = vmul.f32 %v388, %v395
        %399 = vrot.lane.b32.xlu0 %v397, 124
        %v400 = vpop.permute.xlu0 %399
        %v402 = vadd.f32 %v393, %v400
        %v403 = vmul.f32 %v388, %v378
        %405 = vrot.lane.b32.xlu0 %v403, 4
        %v406 = vpop.permute.xlu0 %405
        %v408 = vsub.f32 %v403, %v406
        %vm409 = vcmask 31744
        %v410 = vsel %vm409, %v402, %v408
        %v411 = vpack.c.bf16 %v410, %v410
        %vm412 = vcmask 64512
        %v414 = vsel %vm412, %v411, 0
        %v417 = vsel %vm412, %v379, 0
        %419 = vmatpush.bf16.xpose.msra.mxu0 0
        %420 = vmatpush.bf16.xpose.msra.mxu0 0
        %421 = vmatpush.bf16.xpose.msra.mxu0 0
        %422 = vmatpush.bf16.xpose.msra.mxu0 0
        %423 = vmatpush.bf16.xpose.msra.mxu0 0
        %424 = vmatpush.bf16.xpose.msra.mxu0 0
        %425 = vmatpush.bf16.xpose.msra.mxu0 0
        %426 = vmatpush.bf16.xpose.msra.mxu0 %v417
        %427 = vmatmul.bf16.gmra.mxu0 %v414
        %v428 = vpop.f32.mrf.mxu0
        %v429 = vadd.f32 0.0, %v428
        %v430 = vpop.f32.mrf.mxu0
        %431 = vdwg.mxu0
        %432 = vrot.lane.b32.xlu0 %v378, 28
        %v433 = vpop.permute.xlu0 %432
        %v435 = vmul.f32 %v375, %v433
        %436 = vrot.lane.b32.xlu0 %v378, 36
        %v437 = vpop.permute.xlu0 %436
        %v439 = vmul.f32 %v375, %v437
        %441 = vrot.lane.b32.xlu0 %v439, 124
        %v442 = vpop.permute.xlu0 %441
        %v444 = vadd.f32 %v435, %v442
        %445 = vrot.lane.b32.xlu0 %v378, 32
        %v446 = vpop.permute.xlu0 %445
        %v448 = vmul.f32 %v375, %v446
        %450 = vrot.lane.b32.xlu0 %v448, 4
        %v451 = vpop.permute.xlu0 %450
        %v453 = vsub.f32 %v448, %v451
        %455 = vrot.lane.b32.xlu0 %v444, 96
        %v456 = vpop.permute.xlu0 %455
        %459 = vrot.lane.b32.xlu0 %v453, 96
        %v460 = vpop.permute.xlu0 %459
        %v462 = vsel %vm409, %v456, %v460
        %v463 = vpack.c.bf16 %v462, %v462
        %v465 = vsel %vm412, %v463, 0
        %467 = vmatpush.bf16.xpose.msra.mxu0 0
        %468 = vmatpush.bf16.xpose.msra.mxu0 0
        %469 = vmatpush.bf16.xpose.msra.mxu0 0
        %470 = vmatpush.bf16.xpose.msra.mxu0 0
        %471 = vmatpush.bf16.xpose.msra.mxu0 0
        %472 = vmatpush.bf16.xpose.msra.mxu0 0
        %473 = vmatpush.bf16.xpose.msra.mxu0 0
        %474 = vmatpush.bf16.xpose.msra.mxu0 %v465
        %475 = vmatmul.bf16.gmra.mxu0 %v417
        %v476 = vpop.f32.mrf.mxu0
        %v477 = vadd.f32 0.0, %v476
        %v478 = vpop.f32.mrf.mxu0
        %479 = vdwg.mxu0
        %481 = vrot.lane.b32.xlu0 %v383, 96
        %v482 = vpop.permute.xlu0 %481
        %v484 = vsel %vm412, %v386, 0
        %v487 = vsel %vm412, %v482, 0
        %489 = vmatpush.bf16.xpose.msra.mxu0 0
        %490 = vmatpush.bf16.xpose.msra.mxu0 0
        %491 = vmatpush.bf16.xpose.msra.mxu0 0
        %492 = vmatpush.bf16.xpose.msra.mxu0 0
        %493 = vmatpush.bf16.xpose.msra.mxu0 0
        %494 = vmatpush.bf16.xpose.msra.mxu0 0
        %495 = vmatpush.bf16.xpose.msra.mxu0 0
        %496 = vmatpush.bf16.xpose.msra.mxu0 %v487
        %497 = vmatmul.bf16.gmra.mxu0 %v484
        %v498 = vpop.f32.mrf.mxu0
        %v499 = vadd.f32 %v429, %v498
        %v500 = vpop.f32.mrf.mxu0
        %501 = vdwg.mxu0
        %v502 = vadd.f32 %v499, %v477
        %v504 = vperm.slane %v382, 0
        %v506 = vadd.f32 %v502, %v504
        %v507 = vsel %vm412, %v506, -inf
        %508 = vmax.xlane.f32.xlu0 %v507
        %v509 = vpop.xlane.xlu0 %508
        %v510 = vsub.f32 %v506, %v509
        %v511 = vmul.f32 %v510, 1.442695
        %v512 = vpow.pop %v511
        %v513 = vsel %vm412, %v512, 0.0
        %514 = vadd.xlane.f32.xlu0 %v513
        %v515 = vpop.xlane.xlu0 %514
        %v516 = vrcp.pop %v515
        %v517 = vmul.f32 %v512, %v516
        %v518 = vpack.c.bf16 %v517, %v517
        %519 = vrot.lane.b32.xlu0 %v383, 64
        %v520 = vpop.permute.xlu0 %519
        %v522 = vsel %vm412, %v518, 0
        %vm524 = vcmask 1043456
        %v526 = vsel %vm524, %v520, 0
        %528 = vmatpush.bf16.msra.mxu0 0
        %529 = vmatpush.bf16.msra.mxu0 0
        %530 = vmatpush.bf16.msra.mxu0 0
        %531 = vmatpush.bf16.msra.mxu0 0
        %532 = vmatpush.bf16.msra.mxu0 0
        %533 = vmatpush.bf16.msra.mxu0 0
        %534 = vmatpush.bf16.msra.mxu0 0
        %535 = vmatpush.bf16.msra.mxu0 %v526
        %536 = vmatmul.bf16.gmra.mxu0 %v522
        %v537 = vpop.f32.mrf.mxu0
        %v538 = vadd.f32 0.0, %v537
        %v539 = vpop.f32.mrf.mxu0
        %540 = vdwg.mxu0
        %v541 = vperm.slane %v380, 1
        %543 = vrot.lane.b32.xlu0 %v541, 8
        %v544 = vpop.permute.xlu0 %543
        %v546 = vadd.f32 %v375, %v544
        %v547 = vpack.c.bf16 %v546, %v546
        %v548 = vperm.slane %v381, 1
        %550 = vrot.lane.b32.xlu0 %v548, 8
        %v551 = vpop.permute.xlu0 %550
        %v553 = vadd.f32 %v375, %v551
        %v554 = vmul.f32 %v553, %v395
        %555 = vrot.lane.b32.xlu0 %v378, 12
        %v556 = vpop.permute.xlu0 %555
        %v558 = vmul.f32 %v553, %v556
        %560 = vrot.lane.b32.xlu0 %v558, 124
        %v561 = vpop.permute.xlu0 %560
        %v563 = vadd.f32 %v554, %v561
        %564 = vrot.lane.b32.xlu0 %v378, 8
        %v565 = vpop.permute.xlu0 %564
        %v567 = vmul.f32 %v553, %v565
        %569 = vrot.lane.b32.xlu0 %v567, 4
        %v570 = vpop.permute.xlu0 %569
        %v572 = vsub.f32 %v567, %v570
        %574 = vrot.lane.b32.xlu0 %v563, 120
        %v575 = vpop.permute.xlu0 %574
        %578 = vrot.lane.b32.xlu0 %v572, 120
        %v579 = vpop.permute.xlu0 %578
        %v581 = vsel %vm409, %v575, %v579
        %v582 = vpack.c.bf16 %v581, %v581
        %v584 = vsel %vm412, %v582, 0
        %586 = vmatpush.bf16.xpose.msra.mxu0 0
        %587 = vmatpush.bf16.xpose.msra.mxu0 0
        %588 = vmatpush.bf16.xpose.msra.mxu0 0
        %589 = vmatpush.bf16.xpose.msra.mxu0 0
        %590 = vmatpush.bf16.xpose.msra.mxu0 0
        %591 = vmatpush.bf16.xpose.msra.mxu0 0
        %592 = vmatpush.bf16.xpose.msra.mxu0 0
        %593 = vmatpush.bf16.xpose.msra.mxu0 %v417
        %594 = vmatmul.bf16.gmra.mxu0 %v584
        %v595 = vpop.f32.mrf.mxu0
        %v596 = vadd.f32 0.0, %v595
        %v597 = vpop.f32.mrf.mxu0
        %598 = vdwg.mxu0
        %599 = vrot.lane.b32.xlu0 %v378, 44
        %v600 = vpop.permute.xlu0 %599
        %v602 = vmul.f32 %v375, %v600
        %604 = vrot.lane.b32.xlu0 %v602, 124
        %v605 = vpop.permute.xlu0 %604
        %v607 = vadd.f32 %v439, %v605
        %608 = vrot.lane.b32.xlu0 %v378, 40
        %v609 = vpop.permute.xlu0 %608
        %v611 = vmul.f32 %v375, %v609
        %613 = vrot.lane.b32.xlu0 %v611, 4
        %v614 = vpop.permute.xlu0 %613
        %v616 = vsub.f32 %v611, %v614
        %618 = vrot.lane.b32.xlu0 %v607, 88
        %v619 = vpop.permute.xlu0 %618
        %622 = vrot.lane.b32.xlu0 %v616, 88
        %v623 = vpop.permute.xlu0 %622
        %v625 = vsel %vm409, %v619, %v623
        %v626 = vpack.c.bf16 %v625, %v625
        %v628 = vsel %vm412, %v626, 0
        %630 = vmatpush.bf16.xpose.msra.mxu0 0
        %631 = vmatpush.bf16.xpose.msra.mxu0 0
        %632 = vmatpush.bf16.xpose.msra.mxu0 0
        %633 = vmatpush.bf16.xpose.msra.mxu0 0
        %634 = vmatpush.bf16.xpose.msra.mxu0 0
        %635 = vmatpush.bf16.xpose.msra.mxu0 0
        %636 = vmatpush.bf16.xpose.msra.mxu0 0
        %637 = vmatpush.bf16.xpose.msra.mxu0 %v628
        %638 = vmatmul.bf16.gmra.mxu0 %v417
        %v639 = vpop.f32.mrf.mxu0
        %v640 = vadd.f32 0.0, %v639
        %v641 = vpop.f32.mrf.mxu0
        %642 = vdwg.mxu0
        %644 = vrot.lane.b32.xlu0 %v547, 120
        %v645 = vpop.permute.xlu0 %644
        %646 = vrot.lane.b32.xlu0 %v383, 88
        %v647 = vpop.permute.xlu0 %646
        %v649 = vsel %vm412, %v645, 0
        %v652 = vsel %vm412, %v647, 0
        %654 = vmatpush.bf16.xpose.msra.mxu0 0
        %655 = vmatpush.bf16.xpose.msra.mxu0 0
        %656 = vmatpush.bf16.xpose.msra.mxu0 0
        %657 = vmatpush.bf16.xpose.msra.mxu0 0
        %658 = vmatpush.bf16.xpose.msra.mxu0 0
        %659 = vmatpush.bf16.xpose.msra.mxu0 0
        %660 = vmatpush.bf16.xpose.msra.mxu0 0
        %661 = vmatpush.bf16.xpose.msra.mxu0 %v652
        %662 = vmatmul.bf16.gmra.mxu0 %v649
        %v663 = vpop.f32.mrf.mxu0
        %v664 = vadd.f32 %v596, %v663
        %v665 = vpop.f32.mrf.mxu0
        %666 = vdwg.mxu0
        %v667 = vadd.f32 %v664, %v640
        %v668 = vadd.f32 %v667, %v504
        %v669 = vsel %vm412, %v668, -inf
        %670 = vmax.xlane.f32.xlu0 %v669
        %v671 = vpop.xlane.xlu0 %670
        %v672 = vsub.f32 %v668, %v671
        %v673 = vmul.f32 %v672, 1.442695
        %v674 = vpow.pop %v673
        %v675 = vsel %vm412, %v674, 0.0
        %676 = vadd.xlane.f32.xlu0 %v675
        %v677 = vpop.xlane.xlu0 %676
        %v678 = vrcp.pop %v677
        %v679 = vmul.f32 %v674, %v678
        %v680 = vpack.c.bf16 %v679, %v679
        %681 = vrot.lane.b32.xlu0 %v383, 56
        %v682 = vpop.permute.xlu0 %681
        %v684 = vsel %vm412, %v680, 0
        %v687 = vsel %vm524, %v682, 0
        %689 = vmatpush.bf16.msra.mxu0 0
        %690 = vmatpush.bf16.msra.mxu0 0
        %691 = vmatpush.bf16.msra.mxu0 0
        %692 = vmatpush.bf16.msra.mxu0 0
        %693 = vmatpush.bf16.msra.mxu0 0
        %694 = vmatpush.bf16.msra.mxu0 0
        %695 = vmatpush.bf16.msra.mxu0 0
        %696 = vmatpush.bf16.msra.mxu0 %v687
        %697 = vmatmul.bf16.gmra.mxu0 %v684
        %v698 = vpop.f32.mrf.mxu0
        %v699 = vadd.f32 0.0, %v698
        %v700 = vpop.f32.mrf.mxu0
        %701 = vdwg.mxu0
        %v702 = vperm.slane %v380, 2
        %704 = vrot.lane.b32.xlu0 %v702, 16
        %v705 = vpop.permute.xlu0 %704
        %v707 = vadd.f32 %v375, %v705
        %v708 = vpack.c.bf16 %v707, %v707
        %v709 = vperm.slane %v381, 2
        %711 = vrot.lane.b32.xlu0 %v709, 16
        %v712 = vpop.permute.xlu0 %711
        %v714 = vadd.f32 %v375, %v712
        %v715 = vmul.f32 %v714, %v556
        %716 = vrot.lane.b32.xlu0 %v378, 20
        %v717 = vpop.permute.xlu0 %716
        %v719 = vmul.f32 %v714, %v717
        %721 = vrot.lane.b32.xlu0 %v719, 124
        %v722 = vpop.permute.xlu0 %721
        %v724 = vadd.f32 %v715, %v722
        %725 = vrot.lane.b32.xlu0 %v378, 16
        %v726 = vpop.permute.xlu0 %725
        %v728 = vmul.f32 %v714, %v726
        %730 = vrot.lane.b32.xlu0 %v728, 4
        %v731 = vpop.permute.xlu0 %730
        %v733 = vsub.f32 %v728, %v731
        %735 = vrot.lane.b32.xlu0 %v724, 112
        %v736 = vpop.permute.xlu0 %735
        %739 = vrot.lane.b32.xlu0 %v733, 112
        %v740 = vpop.permute.xlu0 %739
        %v742 = vsel %vm409, %v736, %v740
        %v743 = vpack.c.bf16 %v742, %v742
        %v745 = vsel %vm412, %v743, 0
        %747 = vmatpush.bf16.xpose.msra.mxu0 0
        %748 = vmatpush.bf16.xpose.msra.mxu0 0
        %749 = vmatpush.bf16.xpose.msra.mxu0 0
        %750 = vmatpush.bf16.xpose.msra.mxu0 0
        %751 = vmatpush.bf16.xpose.msra.mxu0 0
        %752 = vmatpush.bf16.xpose.msra.mxu0 0
        %753 = vmatpush.bf16.xpose.msra.mxu0 0
        %754 = vmatpush.bf16.xpose.msra.mxu0 %v417
        %755 = vmatmul.bf16.gmra.mxu0 %v745
        %v756 = vpop.f32.mrf.mxu0
        %v757 = vadd.f32 0.0, %v756
        %v758 = vpop.f32.mrf.mxu0
        %759 = vdwg.mxu0
        %760 = vrot.lane.b32.xlu0 %v378, 52
        %v761 = vpop.permute.xlu0 %760
        %v763 = vmul.f32 %v375, %v761
        %765 = vrot.lane.b32.xlu0 %v763, 124
        %v766 = vpop.permute.xlu0 %765
        %v768 = vadd.f32 %v602, %v766
        %769 = vrot.lane.b32.xlu0 %v378, 48
        %v770 = vpop.permute.xlu0 %769
        %v772 = vmul.f32 %v375, %v770
        %774 = vrot.lane.b32.xlu0 %v772, 4
        %v775 = vpop.permute.xlu0 %774
        %v777 = vsub.f32 %v772, %v775
        %779 = vrot.lane.b32.xlu0 %v768, 80
        %v780 = vpop.permute.xlu0 %779
        %783 = vrot.lane.b32.xlu0 %v777, 80
        %v784 = vpop.permute.xlu0 %783
        %v786 = vsel %vm409, %v780, %v784
        %v787 = vpack.c.bf16 %v786, %v786
        %v789 = vsel %vm412, %v787, 0
        %791 = vmatpush.bf16.xpose.msra.mxu0 0
        %792 = vmatpush.bf16.xpose.msra.mxu0 0
        %793 = vmatpush.bf16.xpose.msra.mxu0 0
        %794 = vmatpush.bf16.xpose.msra.mxu0 0
        %795 = vmatpush.bf16.xpose.msra.mxu0 0
        %796 = vmatpush.bf16.xpose.msra.mxu0 0
        %797 = vmatpush.bf16.xpose.msra.mxu0 0
        %798 = vmatpush.bf16.xpose.msra.mxu0 %v789
        %799 = vmatmul.bf16.gmra.mxu0 %v417
        %v800 = vpop.f32.mrf.mxu0
        %v801 = vadd.f32 0.0, %v800
        %v802 = vpop.f32.mrf.mxu0
        %803 = vdwg.mxu0
        %805 = vrot.lane.b32.xlu0 %v708, 112
        %v806 = vpop.permute.xlu0 %805
        %807 = vrot.lane.b32.xlu0 %v383, 80
        %v808 = vpop.permute.xlu0 %807
        %v810 = vsel %vm412, %v806, 0
        %v813 = vsel %vm412, %v808, 0
        %815 = vmatpush.bf16.xpose.msra.mxu0 0
        %816 = vmatpush.bf16.xpose.msra.mxu0 0
        %817 = vmatpush.bf16.xpose.msra.mxu0 0
        %818 = vmatpush.bf16.xpose.msra.mxu0 0
        %819 = vmatpush.bf16.xpose.msra.mxu0 0
        %820 = vmatpush.bf16.xpose.msra.mxu0 0
        %821 = vmatpush.bf16.xpose.msra.mxu0 0
        %822 = vmatpush.bf16.xpose.msra.mxu0 %v813
        %823 = vmatmul.bf16.gmra.mxu0 %v810
        %v824 = vpop.f32.mrf.mxu0
        %v825 = vadd.f32 %v757, %v824
        %v826 = vpop.f32.mrf.mxu0
        %827 = vdwg.mxu0
        %v828 = vadd.f32 %v825, %v801
        %v829 = vadd.f32 %v828, %v504
        %v830 = vsel %vm412, %v829, -inf
        %831 = vmax.xlane.f32.xlu0 %v830
        %v832 = vpop.xlane.xlu0 %831
        %v833 = vsub.f32 %v829, %v832
        %v834 = vmul.f32 %v833, 1.442695
        %v835 = vpow.pop %v834
        %v836 = vsel %vm412, %v835, 0.0
        %837 = vadd.xlane.f32.xlu0 %v836
        %v838 = vpop.xlane.xlu0 %837
        %v839 = vrcp.pop %v838
        %v840 = vmul.f32 %v835, %v839
        %v841 = vpack.c.bf16 %v840, %v840
        %842 = vrot.lane.b32.xlu0 %v383, 48
        %v843 = vpop.permute.xlu0 %842
        %v845 = vsel %vm412, %v841, 0
        %v848 = vsel %vm524, %v843, 0
        %850 = vmatpush.bf16.msra.mxu0 0
        %851 = vmatpush.bf16.msra.mxu0 0
        %852 = vmatpush.bf16.msra.mxu0 0
        %853 = vmatpush.bf16.msra.mxu0 0
        %854 = vmatpush.bf16.msra.mxu0 0
        %855 = vmatpush.bf16.msra.mxu0 0
        %856 = vmatpush.bf16.msra.mxu0 0
        %857 = vmatpush.bf16.msra.mxu0 %v848
        %858 = vmatmul.bf16.gmra.mxu0 %v845
        %v859 = vpop.f32.mrf.mxu0
        %v860 = vadd.f32 0.0, %v859
        %v861 = vpop.f32.mrf.mxu0
        %862 = vdwg.mxu0
        %v863 = vperm.slane %v380, 3
        %865 = vrot.lane.b32.xlu0 %v863, 24
        %v866 = vpop.permute.xlu0 %865
        %v868 = vadd.f32 %v375, %v866
        %v869 = vpack.c.bf16 %v868, %v868
        %v870 = vperm.slane %v381, 3
        %872 = vrot.lane.b32.xlu0 %v870, 24
        %v873 = vpop.permute.xlu0 %872
        %v875 = vadd.f32 %v375, %v873
        %v876 = vmul.f32 %v875, %v717
        %v877 = vmul.f32 %v875, %v433
        %879 = vrot.lane.b32.xlu0 %v877, 124
        %v880 = vpop.permute.xlu0 %879
        %v882 = vadd.f32 %v876, %v880
        %883 = vrot.lane.b32.xlu0 %v378, 24
        %v884 = vpop.permute.xlu0 %883
        %v886 = vmul.f32 %v875, %v884
        %888 = vrot.lane.b32.xlu0 %v886, 4
        %v889 = vpop.permute.xlu0 %888
        %v891 = vsub.f32 %v886, %v889
        %893 = vrot.lane.b32.xlu0 %v882, 104
        %v894 = vpop.permute.xlu0 %893
        %897 = vrot.lane.b32.xlu0 %v891, 104
        %v898 = vpop.permute.xlu0 %897
        %v900 = vsel %vm409, %v894, %v898
        %v901 = vpack.c.bf16 %v900, %v900
        %v903 = vsel %vm412, %v901, 0
        %905 = vmatpush.bf16.xpose.msra.mxu0 0
        %906 = vmatpush.bf16.xpose.msra.mxu0 0
        %907 = vmatpush.bf16.xpose.msra.mxu0 0
        %908 = vmatpush.bf16.xpose.msra.mxu0 0
        %909 = vmatpush.bf16.xpose.msra.mxu0 0
        %910 = vmatpush.bf16.xpose.msra.mxu0 0
        %911 = vmatpush.bf16.xpose.msra.mxu0 0
        %912 = vmatpush.bf16.xpose.msra.mxu0 %v417
        %913 = vmatmul.bf16.gmra.mxu0 %v903
        %v914 = vpop.f32.mrf.mxu0
        %v915 = vadd.f32 0.0, %v914
        %v916 = vpop.f32.mrf.mxu0
        %917 = vdwg.mxu0
        %918 = vrot.lane.b32.xlu0 %v378, 60
        %v919 = vpop.permute.xlu0 %918
        %v921 = vmul.f32 %v375, %v919
        %923 = vrot.lane.b32.xlu0 %v921, 124
        %v924 = vpop.permute.xlu0 %923
        %v926 = vadd.f32 %v763, %v924
        %927 = vrot.lane.b32.xlu0 %v378, 56
        %v928 = vpop.permute.xlu0 %927
        %v930 = vmul.f32 %v375, %v928
        %932 = vrot.lane.b32.xlu0 %v930, 4
        %v933 = vpop.permute.xlu0 %932
        %v935 = vsub.f32 %v930, %v933
        %937 = vrot.lane.b32.xlu0 %v926, 72
        %v938 = vpop.permute.xlu0 %937
        %941 = vrot.lane.b32.xlu0 %v935, 72
        %v942 = vpop.permute.xlu0 %941
        %v944 = vsel %vm409, %v938, %v942
        %v945 = vpack.c.bf16 %v944, %v944
        %v947 = vsel %vm412, %v945, 0
        %949 = vmatpush.bf16.xpose.msra.mxu0 0
        %950 = vmatpush.bf16.xpose.msra.mxu0 0
        %951 = vmatpush.bf16.xpose.msra.mxu0 0
        %952 = vmatpush.bf16.xpose.msra.mxu0 0
        %953 = vmatpush.bf16.xpose.msra.mxu0 0
        %954 = vmatpush.bf16.xpose.msra.mxu0 0
        %955 = vmatpush.bf16.xpose.msra.mxu0 0
        %956 = vmatpush.bf16.xpose.msra.mxu0 %v947
        %957 = vmatmul.bf16.gmra.mxu0 %v417
        %v958 = vpop.f32.mrf.mxu0
        %v959 = vadd.f32 0.0, %v958
        %v960 = vpop.f32.mrf.mxu0
        %961 = vdwg.mxu0
        %963 = vrot.lane.b32.xlu0 %v869, 104
        %v964 = vpop.permute.xlu0 %963
        %965 = vrot.lane.b32.xlu0 %v383, 72
        %v966 = vpop.permute.xlu0 %965
        %v968 = vsel %vm412, %v964, 0
        %v971 = vsel %vm412, %v966, 0
        %973 = vmatpush.bf16.xpose.msra.mxu0 0
        %974 = vmatpush.bf16.xpose.msra.mxu0 0
        %975 = vmatpush.bf16.xpose.msra.mxu0 0
        %976 = vmatpush.bf16.xpose.msra.mxu0 0
        %977 = vmatpush.bf16.xpose.msra.mxu0 0
        %978 = vmatpush.bf16.xpose.msra.mxu0 0
        %979 = vmatpush.bf16.xpose.msra.mxu0 0
        %980 = vmatpush.bf16.xpose.msra.mxu0 %v971
        %981 = vmatmul.bf16.gmra.mxu0 %v968
        %v982 = vpop.f32.mrf.mxu0
        %v983 = vadd.f32 %v915, %v982
        %v984 = vpop.f32.mrf.mxu0
        %985 = vdwg.mxu0
        %v986 = vadd.f32 %v983, %v959
        %v987 = vadd.f32 %v986, %v504
        %v988 = vsel %vm412, %v987, -inf
        %989 = vmax.xlane.f32.xlu0 %v988
        %v990 = vpop.xlane.xlu0 %989
        %v991 = vsub.f32 %v987, %v990
        %v992 = vmul.f32 %v991, 1.442695
        %v993 = vpow.pop %v992
        %v994 = vsel %vm412, %v993, 0.0
        %995 = vadd.xlane.f32.xlu0 %v994
        %v996 = vpop.xlane.xlu0 %995
        %v997 = vrcp.pop %v996
        %v998 = vmul.f32 %v993, %v997
        %v999 = vpack.c.bf16 %v998, %v998
        %1000 = vrot.lane.b32.xlu0 %v383, 40
        %v1001 = vpop.permute.xlu0 %1000
        %v1003 = vsel %vm412, %v999, 0
        %v1006 = vsel %vm524, %v1001, 0
        %1008 = vmatpush.bf16.msra.mxu0 0
        %1009 = vmatpush.bf16.msra.mxu0 0
        %1010 = vmatpush.bf16.msra.mxu0 0
        %1011 = vmatpush.bf16.msra.mxu0 0
        %1012 = vmatpush.bf16.msra.mxu0 0
        %1013 = vmatpush.bf16.msra.mxu0 0
        %1014 = vmatpush.bf16.msra.mxu0 0
        %1015 = vmatpush.bf16.msra.mxu0 %v1006
        %1016 = vmatmul.bf16.gmra.mxu0 %v1003
        %v1017 = vpop.f32.mrf.mxu0
        %v1018 = vadd.f32 0.0, %v1017
        %v1019 = vpop.f32.mrf.mxu0
        %1020 = vdwg.mxu0
        %1022 = vrot.lane.b32.xlu0 %v699, 8
        %v1023 = vpop.permute.xlu0 %1022
        %1026 = vrot.lane.b32.xlu0 %v860, 16
        %v1027 = vpop.permute.xlu0 %1026
        %1030 = vrot.lane.b32.xlu0 %v1018, 24
        %v1031 = vpop.permute.xlu0 %1030
        %v1033 = vsel %vm412, %v538, %v1023
        %vm1034 = vcmask 130048
        %v1035 = vsel %vm1034, %v1033, %v1027
        %vm1036 = vcmask 195584
        %v1037 = vsel %vm1036, %v1035, %v1031
        %1038 = vst.msk [vmem:[%s339] sm:$0xff] %vm361, %v1037
        %s1039 = sand.u32 %s169, 1
        %s1040 = scalar_lea.sflag [#allocation4], %s1039
        %s1041 = sand.u32 %s169, 1
        %s1042 = smul.addr %s1041, 8
        %s1043 = scalar_lea.vmem [#allocation11], %s1042
        // Predicated region
        $region65: #{tpu_custom_call.1} parent=43 // pred_check
          %p1044 = pneg %p179
        $region66: #{tpu_custom_call.1} parent=43 // pred_check_branch
          %1046 = sbr.rel (%p1044) target = $region68
        $region67: #{tpu_custom_call.1} parent=43 // pred_region
          %1048 = vsyncadd %s1040, 0
          %s1049 = smul.addr %s25, 8
          %s1050 = scalar_lea.hbm %s6, %s1049
          %s1052 = sshll.u32 %s1043, 4
          %s1053 = int_to_ptr.vmem [resolvable:$true] %s1052
          %s1054 = sshll.u32 %s1050, 4
          %s1055 = int_to_ptr.hbm [resolvable:$true] %s1054
          %1057 = dma.vmem_to_hbm [thread:$0]  %s1053, 128, %s1055, %s1040
        $region68: #{tpu_custom_call.1} parent=43 // pred_fallthru
          _
      $region44: #{tpu_custom_call.1} parent=5 // pred_fallthru
        _
      %p1058 = scmp.le.s32.totalorder 2, %s20
      // Predicated region
      $region69: #{tpu_custom_call.1} parent=5 // pred_check
        %p1059 = pneg %p1058
      $region70: #{tpu_custom_call.1} parent=5 // pred_check_branch
        %1061 = sbr.rel (%p1059) target = $region72
      $region71: #{tpu_custom_call.1} parent=5 // pred_region
        %s1062 = ssub.s32 %s20, 2
        // Predicated region
        $region73: #{tpu_custom_call.1} parent=71 // pred_check
          %p1063 = pneg %p185
        $region74: #{tpu_custom_call.1} parent=71 // pred_check_branch
          %1065 = sbr.rel (%p1063) target = $region76
        $region75: #{tpu_custom_call.1} parent=71 // pred_region
          %s1066 = sand.u32 %s170, 1
          %s1067 = scalar_lea.sflag [#allocation4], %s1066
          %s1068 = sand.u32 %s170, 1
          %s1069 = smul.addr %s1068, 8
          %s1070 = scalar_lea.vmem [#allocation11], %s1069
          %1072 = dma.done %s1067, 128
        $region76: #{tpu_custom_call.1} parent=71 // pred_fallthru
          _
      $region72: #{tpu_custom_call.1} parent=5 // pred_fallthru
        _
    $region6: #{tpu_custom_call.1} parent=1 // loop_footer
      %s24 = sadd.s32 1, %s20
    $region7: #{tpu_custom_call.1} parent=1 // loop_footer_branch
      %19 = sbr.rel target = $region3
    $region8: #{tpu_custom_call.1} parent=1 // loop_exit
      _
    %1073 = vsyncpa [#allocation3], 1
    %s1074 = scalar_lea.sflag [#allocation3], 1
    %1075 = vsyncpa %s1074, 1
    %1076 = vsyncpa [#allocation6], 1
    %1077 = vsyncpa [#allocation9], 1
    %1078 = vsyncpa [#allocation4], 1
    %s1079 = scalar_lea.sflag [#allocation4], 1
    %1080 = vsyncpa %s1079, 1

</llo_original>
